<compile_context>
chip_gen: v5e
topology: v5e:2x2
jax: 0.10.0
libtpu: 0.0.40
codegen_flags: <defaults>
</compile_context>

<pallas_src>
import functools

import jax
import jax.numpy as jnp
from jax import lax
from jax.experimental import pallas as pl
from jax.experimental.pallas import tpu as pltpu


def _conv_stats_kernel(xp_ref, w_ref, y_ref, sum_ref, ssq_ref, *,
                       H_t, W, C_in, C_out, K, dilation):
    """Pass 1: ReLU -> fused depthwise-dilated + 1x1 conv -> conv tile + BN partials.

    xp_ref  : [1, Hp, Wp, C_in]    full zero-padded image of batch n
                                   (block index independent of h -> stays resident)
    w_ref   : [K*K, C_in, C_out]   fused per-tap weights (dw[tap,c] * pw[c,o])
    y_ref   : [H_t*W, C_out]       conv output rows for this tile
    sum_ref : [1, 1, C_out]        per-tile sum of y      (BN partial)
    ssq_ref : [1, 1, C_out]        per-tile sum of y*y    (BN partial)
    """
    halo = (K - 1) * dilation
    row0 = pl.multiple_of(pl.program_id(1) * H_t, H_t)

    # Load the halo'd row slab once and apply ReLU once (ReLU(0-pad) == 0).
    xs = jnp.maximum(xp_ref[0, pl.ds(row0, H_t + halo), :, :], 0.0)

    # K*K small MXU matmuls with per-tap fused weights, accumulated in f32.
    acc = jnp.zeros((H_t * W, C_out), jnp.float32)
    for kh in range(K):
        for kw in range(K):
            win = xs[kh * dilation:kh * dilation + H_t,
                     kw * dilation:kw * dilation + W, :]           # [H_t, W, C_in]
            acc = acc + jnp.dot(win.reshape(H_t * W, C_in),
                                w_ref[kh * K + kw],
                                preferred_element_type=jnp.float32)

    # NOTE: with tiny C_out this store is lane-masked; the lane-dense layout is
    # recovered for free (contiguous reshape) before the BN-apply pass.
    y_ref[...] = acc

    # BatchNorm partial statistics (global reduction finished outside the grid,
    # so batch stats remain exact across tiles / cores).
    sum_ref[0] = jnp.sum(acc, axis=0, keepdims=True)
    ssq_ref[0] = jnp.sum(acc * acc, axis=0, keepdims=True)


def _bn_apply_kernel(y_ref, scale_ref, shift_ref, out_ref):
    """Pass 2: lane-dense y * scale + shift over [H_t, W*C_out] tiles."""
    out_ref[...] = y_ref[...] * scale_ref[...] + shift_ref[...]


def dil_conv(x_nchw, dw_oihw, pw_oihw, gamma, beta, *,
             stride=1, padding=2, dilation=2, eps=1e-5):
    """DilConv forward. NCHW in / NCHW out, parameters in PyTorch layouts."""
    assert stride == 1  # TODO(synk): wire stride=2 output subsampling into the index_maps.
    N, C_in, H, W = x_nchw.shape
    C_out = pw_oihw.shape[0]
    K = dw_oihw.shape[2]
    halo = (K - 1) * dilation
    assert 2 * padding == halo, "expects 'same' dilated conv (2*padding == (K-1)*dilation)"
    assert H % 8 == 0, "H must be a multiple of 8 for the row tiling used here"

    H_t = 8                      # row tile (sublane-aligned); H_t*W = matmul M dim
    gh = H // H_t
    Hp, Wp = H + 2 * padding, W + 2 * padding
    WC = W * C_out

    # ---- glue: layout conversion + zero padding (plain JAX) ----------------
    # TODO(synk): accept NHWC input and fold the W/H border padding into the
    # kernel (masked border taps) to remove this extra HBM round trip.
    x = jnp.transpose(x_nchw, (0, 2, 3, 1)).astype(jnp.float32)          # NHWC
    xp = jnp.pad(x, ((0, 0), (padding, padding), (padding, padding), (0, 0)))

    # Fused per-tap weights: W_tap[tap, c, o] = dw[c, kh, kw] * pw[o, c].
    dw_taps = jnp.transpose(dw_oihw[:, 0, :, :], (1, 2, 0)).reshape(K * K, C_in)
    pw_t = jnp.transpose(pw_oihw[:, :, 0, 0], (1, 0))                    # [C_in, C_out]
    w_fused = (dw_taps[:, :, None] * pw_t[None, :, :]).astype(jnp.float32)

    kernel1 = functools.partial(
        _conv_stats_kernel, H_t=H_t, W=W, C_in=C_in, C_out=C_out,
        K=K, dilation=dilation)

    flops1 = 2 * K * K * C_in * C_out * N * H * W + N * Hp * Wp * C_in \
        + 3 * N * H * W * C_out
    bytes1 = 4 * (N * Hp * Wp * C_in + K * K * C_in * C_out
                  + N * H * W * C_out + 2 * N * gh * C_out)

    y_flat, s_part, ss_part = pl.pallas_call(
        kernel1,
        grid=(N, gh),
        in_specs=[
            pl.BlockSpec((1, Hp, Wp, C_in), lambda n, h: (n, 0, 0, 0)),
            pl.BlockSpec((K * K, C_in, C_out), lambda n, h: (0, 0, 0)),
        ],
        out_specs=(
            pl.BlockSpec((H_t * W, C_out), lambda n, h: (n * gh + h, 0)),
            pl.BlockSpec((1, 1, C_out), lambda n, h: (n * gh + h, 0, 0)),
            pl.BlockSpec((1, 1, C_out), lambda n, h: (n * gh + h, 0, 0)),
        ),
        out_shape=(
            jax.ShapeDtypeStruct((N * H * W, C_out), jnp.float32),
            jax.ShapeDtypeStruct((N * gh, 1, C_out), jnp.float32),
            jax.ShapeDtypeStruct((N * gh, 1, C_out), jnp.float32),
        ),
        compiler_params=pltpu.CompilerParams(
            dimension_semantics=("parallel", "parallel"),
            vmem_limit_bytes=32 * 1024 * 1024),
        cost_estimate=pl.CostEstimate(flops=flops1, transcendentals=0,
                                      bytes_accessed=bytes1),
    )(xp, w_fused)

    # ---- global BN statistics (tiny [C_out] scalar math in plain JAX) ------
    cnt = float(N * H * W)
    mean = jnp.sum(s_part[:, 0, :], axis=0) / cnt
    var = jnp.sum(ss_part[:, 0, :], axis=0) / cnt - mean * mean
    scale = gamma.astype(jnp.float32) * lax.rsqrt(var + eps)
    shift = beta.astype(jnp.float32) - mean * scale
    scale_row = jnp.tile(scale, W)[None, :]          # [1, W*C_out], matches w*C_out+o
    shift_row = jnp.tile(shift, W)[None, :]

    # Lane-dense view of the conv output (contiguous reshape -> no data movement).
    y2d = y_flat.reshape(N * H, WC)

    flops2 = 2 * N * H * W * C_out
    bytes2 = 4 * (2 * N * H * W * C_out + 2 * WC)

    out2d = pl.pallas_call(
        _bn_apply_kernel,
        grid=(N * gh,),
        in_specs=[
            pl.BlockSpec((H_t, WC), lambda r: (r, 0)),
            pl.BlockSpec((1, WC), lambda r: (0, 0)),
            pl.BlockSpec((1, WC), lambda r: (0, 0)),
        ],
        out_specs=pl.BlockSpec((H_t, WC), lambda r: (r, 0)),
        out_shape=jax.ShapeDtypeStruct((N * H, WC), jnp.float32),
        compiler_params=pltpu.CompilerParams(
            dimension_semantics=("parallel",),
            vmem_limit_bytes=32 * 1024 * 1024),
        cost_estimate=pl.CostEstimate(flops=flops2, transcendentals=0,
                                      bytes_accessed=bytes2),
    )(y2d, scale_row, shift_row)

    out_nhwc = out2d.reshape(N, H, W, C_out)
    return jnp.transpose(out_nhwc, (0, 3, 1, 2))                          # NCHW


def dil_conv_ref(x, dw_oihw, pw_oihw, gamma, beta,
                 *, stride=1, padding=2, dilation=2, eps=1e-5):
    """Pure-JAX reference mirroring the PyTorch module (training-mode BN)."""
    y = jnp.maximum(x, 0.0)
    dn = lax.conv_dimension_numbers(y.shape, dw_oihw.shape, ('NCHW', 'OIHW', 'NCHW'))
    y = lax.conv_general_dilated(
        y, dw_oihw, (stride, stride), [(padding, padding)] * 2,
        rhs_dilation=(dilation, dilation), dimension_numbers=dn,
        feature_group_count=x.shape[1])
    dn2 = lax.conv_dimension_numbers(y.shape, pw_oihw.shape, ('NCHW', 'OIHW', 'NCHW'))
    y = lax.conv_general_dilated(y, pw_oihw, (1, 1), [(0, 0)] * 2,
                                 dimension_numbers=dn2)
    mean = jnp.mean(y, axis=(0, 2, 3), keepdims=True)
    var = jnp.mean((y - mean) ** 2, axis=(0, 2, 3), keepdims=True)
    y = (y - mean) * lax.rsqrt(var + eps)
    return y * gamma.reshape(1, -1, 1, 1) + beta.reshape(1, -1, 1, 1)


if __name__ == "__main__":
    # Small, deterministic problem: N=2, C_in=4, C_out=8, H=W=16 (dil_conv_3x3).
    N, C_in, C_out, H, W, K = 2, 4, 8, 16, 16, 3
    stride, padding, dilation = 1, 2, 2

    key = jax.random.PRNGKey(0)
    kx, kdw, kpw = jax.random.split(key, 3)
    x = jax.random.normal(kx, (N, C_in, H, W), jnp.float32)
    # Depthwise conv weight, PyTorch layout [C_in, 1, K, K] (groups=C_in).
    dw_w = jax.random.normal(kdw, (C_in, 1, K, K), jnp.float32) * 0.2
    # Pointwise conv weight, PyTorch layout [C_out, C_in, 1, 1].
    pw_w = jax.random.normal(kpw, (C_out, C_in, 1, 1), jnp.float32) * 0.2
    # BatchNorm affine params at PyTorch init: gamma=1, beta=0.
    gamma = jnp.ones((C_out,), jnp.float32)
    beta = jnp.zeros((C_out,), jnp.float32)

    out = dil_conv(x, dw_w, pw_w, gamma, beta,
                   stride=stride, padding=padding, dilation=dilation)
    out = jax.block_until_ready(out)

    ref = dil_conv_ref(x, dw_w, pw_w, gamma, beta,
                       stride=stride, padding=padding, dilation=dilation)
    assert out.shape == (N, C_out, H, W)
    assert jnp.allclose(out, ref, atol=1e-4, rtol=1e-4), \
        f"max abs err {jnp.max(jnp.abs(out - ref))}"

    print("KERNEL_OK")
</pallas_src>

<mosaic_0001>
module attributes {stable_mosaic.version = 11 : i64} {
  func.func @_conv_stats_kernel(%arg0: i32, %arg1: i32, %arg2: memref<1x20x20x4xf32, #tpu.memory_space<vmem>>, %arg3: memref<9x4x8xf32, #tpu.memory_space<vmem>>, %arg4: memref<128x8xf32, #tpu.memory_space<vmem>>, %arg5: memref<1x1x8xf32, #tpu.memory_space<vmem>>, %arg6: memref<1x1x8xf32, #tpu.memory_space<vmem>>) attributes {dimension_semantics = [#tpu.dimension_semantics<parallel>, #tpu.dimension_semantics<parallel>], iteration_bounds = array<i64: 2, 2>, scalar_prefetch = 0 : i64, scratch_operands = 0 : i64, tpu.core_type = #tpu.core_type<tc>, window_params = [{transform_indices = @transform_0, window_bounds = array<i64: 1, 20, 20, 4>}, {pipeline_mode = #tpu.pipeline_mode<synchronous>, transform_indices = @transform_1, window_bounds = array<i64: 9, 4, 8>}, {transform_indices = @transform_2, window_bounds = array<i64: 128, 8>}, {transform_indices = @transform_3, window_bounds = array<i64: 1, 1, 8>}, {transform_indices = @transform_4, window_bounds = array<i64: 1, 1, 8>}]} {
    %c8_i32 = arith.constant 8 : i32
    %0 = arith.muli %arg1, %c8_i32 : i32
    %1 = tpu.assume_multiple %0, 8 : i32
    %c0 = arith.constant 0 : index
    %2 = arith.index_cast %1 : i32 to index
    %c0_0 = arith.constant 0 : index
    %c0_1 = arith.constant 0 : index
    %3 = vector.load %arg2[%c0, %2, %c0_0, %c0_1] : memref<1x20x20x4xf32, #tpu.memory_space<vmem>>, vector<1x12x20x4xf32>
    %4 = vector.shape_cast %3 : vector<1x12x20x4xf32> to vector<12x20x4xf32>
    %cst = arith.constant 0.000000e+00 : f32
    %5 = vector.broadcast %cst : f32 to vector<12x20x4xf32>
    %6 = arith.maximumf %4, %5 : vector<12x20x4xf32>
    %cst_2 = arith.constant 0.000000e+00 : f32
    %7 = vector.broadcast %cst_2 : f32 to vector<128x8xf32>
    %8 = vector.extract_strided_slice %6 {offsets = [0, 0, 0], sizes = [8, 16, 4], strides = [1, 1, 1]} : vector<12x20x4xf32> to vector<8x16x4xf32>
    %9 = vector.shape_cast %8 : vector<8x16x4xf32> to vector<128x4xf32>
    %c0_3 = arith.constant 0 : index
    %c0_4 = arith.constant 0 : index
    %c0_5 = arith.constant 0 : index
    %10 = vector.load %arg3[%c0_3, %c0_4, %c0_5] : memref<9x4x8xf32, #tpu.memory_space<vmem>>, vector<1x4x8xf32>
    %11 = vector.shape_cast %10 : vector<1x4x8xf32> to vector<4x8xf32>
    %cst_6 = arith.constant dense<0.000000e+00> : vector<128x8xf32>
    %12 = tpu.matmul %9, %11, %cst_6 {dimension_numbers = #tpu.dot_dimension_numbers<[1], [0], [0], [1], [0, 0, 1, 1], [], []>} : vector<128x4xf32>, vector<4x8xf32>, vector<128x8xf32> -> vector<128x8xf32>
    %13 = arith.addf %7, %12 : vector<128x8xf32>
    %14 = vector.extract_strided_slice %6 {offsets = [0, 2, 0], sizes = [8, 16, 4], strides = [1, 1, 1]} : vector<12x20x4xf32> to vector<8x16x4xf32>
    %15 = vector.shape_cast %14 : vector<8x16x4xf32> to vector<128x4xf32>
    %c1 = arith.constant 1 : index
    %c0_7 = arith.constant 0 : index
    %c0_8 = arith.constant 0 : index
    %16 = vector.load %arg3[%c1, %c0_7, %c0_8] : memref<9x4x8xf32, #tpu.memory_space<vmem>>, vector<1x4x8xf32>
    %17 = vector.shape_cast %16 : vector<1x4x8xf32> to vector<4x8xf32>
    %cst_9 = arith.constant dense<0.000000e+00> : vector<128x8xf32>
    %18 = tpu.matmul %15, %17, %cst_9 {dimension_numbers = #tpu.dot_dimension_numbers<[1], [0], [0], [1], [0, 0, 1, 1], [], []>} : vector<128x4xf32>, vector<4x8xf32>, vector<128x8xf32> -> vector<128x8xf32>
    %19 = arith.addf %13, %18 : vector<128x8xf32>
    %20 = vector.extract_strided_slice %6 {offsets = [0, 4, 0], sizes = [8, 16, 4], strides = [1, 1, 1]} : vector<12x20x4xf32> to vector<8x16x4xf32>
    %21 = vector.shape_cast %20 : vector<8x16x4xf32> to vector<128x4xf32>
    %c2 = arith.constant 2 : index
    %c0_10 = arith.constant 0 : index
    %c0_11 = arith.constant 0 : index
    %22 = vector.load %arg3[%c2, %c0_10, %c0_11] : memref<9x4x8xf32, #tpu.memory_space<vmem>>, vector<1x4x8xf32>
    %23 = vector.shape_cast %22 : vector<1x4x8xf32> to vector<4x8xf32>
    %cst_12 = arith.constant dense<0.000000e+00> : vector<128x8xf32>
    %24 = tpu.matmul %21, %23, %cst_12 {dimension_numbers = #tpu.dot_dimension_numbers<[1], [0], [0], [1], [0, 0, 1, 1], [], []>} : vector<128x4xf32>, vector<4x8xf32>, vector<128x8xf32> -> vector<128x8xf32>
    %25 = arith.addf %19, %24 : vector<128x8xf32>
    %26 = vector.extract_strided_slice %6 {offsets = [2, 0, 0], sizes = [8, 16, 4], strides = [1, 1, 1]} : vector<12x20x4xf32> to vector<8x16x4xf32>
    %27 = vector.shape_cast %26 : vector<8x16x4xf32> to vector<128x4xf32>
    %c3 = arith.constant 3 : index
    %c0_13 = arith.constant 0 : index
    %c0_14 = arith.constant 0 : index
    %28 = vector.load %arg3[%c3, %c0_13, %c0_14] : memref<9x4x8xf32, #tpu.memory_space<vmem>>, vector<1x4x8xf32>
    %29 = vector.shape_cast %28 : vector<1x4x8xf32> to vector<4x8xf32>
    %cst_15 = arith.constant dense<0.000000e+00> : vector<128x8xf32>
    %30 = tpu.matmul %27, %29, %cst_15 {dimension_numbers = #tpu.dot_dimension_numbers<[1], [0], [0], [1], [0, 0, 1, 1], [], []>} : vector<128x4xf32>, vector<4x8xf32>, vector<128x8xf32> -> vector<128x8xf32>
    %31 = arith.addf %25, %30 : vector<128x8xf32>
    %32 = vector.extract_strided_slice %6 {offsets = [2, 2, 0], sizes = [8, 16, 4], strides = [1, 1, 1]} : vector<12x20x4xf32> to vector<8x16x4xf32>
    %33 = vector.shape_cast %32 : vector<8x16x4xf32> to vector<128x4xf32>
    %c4 = arith.constant 4 : index
    %c0_16 = arith.constant 0 : index
    %c0_17 = arith.constant 0 : index
    %34 = vector.load %arg3[%c4, %c0_16, %c0_17] : memref<9x4x8xf32, #tpu.memory_space<vmem>>, vector<1x4x8xf32>
    %35 = vector.shape_cast %34 : vector<1x4x8xf32> to vector<4x8xf32>
    %cst_18 = arith.constant dense<0.000000e+00> : vector<128x8xf32>
    %36 = tpu.matmul %33, %35, %cst_18 {dimension_numbers = #tpu.dot_dimension_numbers<[1], [0], [0], [1], [0, 0, 1, 1], [], []>} : vector<128x4xf32>, vector<4x8xf32>, vector<128x8xf32> -> vector<128x8xf32>
    %37 = arith.addf %31, %36 : vector<128x8xf32>
    %38 = vector.extract_strided_slice %6 {offsets = [2, 4, 0], sizes = [8, 16, 4], strides = [1, 1, 1]} : vector<12x20x4xf32> to vector<8x16x4xf32>
    %39 = vector.shape_cast %38 : vector<8x16x4xf32> to vector<128x4xf32>
    %c5 = arith.constant 5 : index
    %c0_19 = arith.constant 0 : index
    %c0_20 = arith.constant 0 : index
    %40 = vector.load %arg3[%c5, %c0_19, %c0_20] : memref<9x4x8xf32, #tpu.memory_space<vmem>>, vector<1x4x8xf32>
    %41 = vector.shape_cast %40 : vector<1x4x8xf32> to vector<4x8xf32>
    %cst_21 = arith.constant dense<0.000000e+00> : vector<128x8xf32>
    %42 = tpu.matmul %39, %41, %cst_21 {dimension_numbers = #tpu.dot_dimension_numbers<[1], [0], [0], [1], [0, 0, 1, 1], [], []>} : vector<128x4xf32>, vector<4x8xf32>, vector<128x8xf32> -> vector<128x8xf32>
    %43 = arith.addf %37, %42 : vector<128x8xf32>
    %44 = vector.extract_strided_slice %6 {offsets = [4, 0, 0], sizes = [8, 16, 4], strides = [1, 1, 1]} : vector<12x20x4xf32> to vector<8x16x4xf32>
    %45 = vector.shape_cast %44 : vector<8x16x4xf32> to vector<128x4xf32>
    %c6 = arith.constant 6 : index
    %c0_22 = arith.constant 0 : index
    %c0_23 = arith.constant 0 : index
    %46 = vector.load %arg3[%c6, %c0_22, %c0_23] : memref<9x4x8xf32, #tpu.memory_space<vmem>>, vector<1x4x8xf32>
    %47 = vector.shape_cast %46 : vector<1x4x8xf32> to vector<4x8xf32>
    %cst_24 = arith.constant dense<0.000000e+00> : vector<128x8xf32>
    %48 = tpu.matmul %45, %47, %cst_24 {dimension_numbers = #tpu.dot_dimension_numbers<[1], [0], [0], [1], [0, 0, 1, 1], [], []>} : vector<128x4xf32>, vector<4x8xf32>, vector<128x8xf32> -> vector<128x8xf32>
    %49 = arith.addf %43, %48 : vector<128x8xf32>
    %50 = vector.extract_strided_slice %6 {offsets = [4, 2, 0], sizes = [8, 16, 4], strides = [1, 1, 1]} : vector<12x20x4xf32> to vector<8x16x4xf32>
    %51 = vector.shape_cast %50 : vector<8x16x4xf32> to vector<128x4xf32>
    %c7 = arith.constant 7 : index
    %c0_25 = arith.constant 0 : index
    %c0_26 = arith.constant 0 : index
    %52 = vector.load %arg3[%c7, %c0_25, %c0_26] : memref<9x4x8xf32, #tpu.memory_space<vmem>>, vector<1x4x8xf32>
    %53 = vector.shape_cast %52 : vector<1x4x8xf32> to vector<4x8xf32>
    %cst_27 = arith.constant dense<0.000000e+00> : vector<128x8xf32>
    %54 = tpu.matmul %51, %53, %cst_27 {dimension_numbers = #tpu.dot_dimension_numbers<[1], [0], [0], [1], [0, 0, 1, 1], [], []>} : vector<128x4xf32>, vector<4x8xf32>, vector<128x8xf32> -> vector<128x8xf32>
    %55 = arith.addf %49, %54 : vector<128x8xf32>
    %56 = vector.extract_strided_slice %6 {offsets = [4, 4, 0], sizes = [8, 16, 4], strides = [1, 1, 1]} : vector<12x20x4xf32> to vector<8x16x4xf32>
    %57 = vector.shape_cast %56 : vector<8x16x4xf32> to vector<128x4xf32>
    %c8 = arith.constant 8 : index
    %c0_28 = arith.constant 0 : index
    %c0_29 = arith.constant 0 : index
    %58 = vector.load %arg3[%c8, %c0_28, %c0_29] : memref<9x4x8xf32, #tpu.memory_space<vmem>>, vector<1x4x8xf32>
    %59 = vector.shape_cast %58 : vector<1x4x8xf32> to vector<4x8xf32>
    %cst_30 = arith.constant dense<0.000000e+00> : vector<128x8xf32>
    %60 = tpu.matmul %57, %59, %cst_30 {dimension_numbers = #tpu.dot_dimension_numbers<[1], [0], [0], [1], [0, 0, 1, 1], [], []>} : vector<128x4xf32>, vector<4x8xf32>, vector<128x8xf32> -> vector<128x8xf32>
    %61 = arith.addf %55, %60 : vector<128x8xf32>
    %c0_31 = arith.constant 0 : index
    %c0_32 = arith.constant 0 : index
    %62 = vector.load %arg4[%c0_31, %c0_32] : memref<128x8xf32, #tpu.memory_space<vmem>>, vector<128x8xf32>
    tpu.vector_store %arg4[%c0_31, %c0_32], %61 {strides = array<i32>} : memref<128x8xf32, #tpu.memory_space<vmem>>, vector<128x8xf32>,
    %cst_33 = arith.constant dense<0.000000e+00> : vector<8xf32>
    %63 = vector.multi_reduction <add>, %61, %cst_33 [0] : vector<128x8xf32> to vector<8xf32>
    %64 = vector.shape_cast %63 : vector<8xf32> to vector<1x8xf32>
    %c0_34 = arith.constant 0 : index
    %c0_35 = arith.constant 0 : index
    %c0_36 = arith.constant 0 : index
    %65 = vector.load %arg5[%c0_34, %c0_35, %c0_36] : memref<1x1x8xf32, #tpu.memory_space<vmem>>, vector<1x1x8xf32>
    %66 = vector.shape_cast %65 : vector<1x1x8xf32> to vector<1x8xf32>
    %67 = vector.shape_cast %64 : vector<1x8xf32> to vector<1x1x8xf32>
    tpu.vector_store %arg5[%c0_34, %c0_35, %c0_36], %67 {strides = array<i32>} : memref<1x1x8xf32, #tpu.memory_space<vmem>>, vector<1x1x8xf32>,
    %68 = arith.mulf %61, %61 : vector<128x8xf32>
    %cst_37 = arith.constant dense<0.000000e+00> : vector<8xf32>
    %69 = vector.multi_reduction <add>, %68, %cst_37 [0] : vector<128x8xf32> to vector<8xf32>
    %70 = vector.shape_cast %69 : vector<8xf32> to vector<1x8xf32>
    %c0_38 = arith.constant 0 : index
    %c0_39 = arith.constant 0 : index
    %c0_40 = arith.constant 0 : index
    %71 = vector.load %arg6[%c0_38, %c0_39, %c0_40] : memref<1x1x8xf32, #tpu.memory_space<vmem>>, vector<1x1x8xf32>
    %72 = vector.shape_cast %71 : vector<1x1x8xf32> to vector<1x8xf32>
    %73 = vector.shape_cast %70 : vector<1x8xf32> to vector<1x1x8xf32>
    tpu.vector_store %arg6[%c0_38, %c0_39, %c0_40], %73 {strides = array<i32>} : memref<1x1x8xf32, #tpu.memory_space<vmem>>, vector<1x1x8xf32>,
    return
  }
  func.func @transform_0(%arg0: i32, %arg1: i32) -> (i32, i32, i32, i32) {
    %c0_i32 = arith.constant 0 : i32
    %c0_i32_0 = arith.constant 0 : i32
    %c0_i32_1 = arith.constant 0 : i32
    %c0_i32_2 = arith.constant 0 : i32
    return %arg0, %c0_i32, %c0_i32_0, %c0_i32_1 : i32, i32, i32, i32
  }
  func.func @transform_1(%arg0: i32, %arg1: i32) -> (i32, i32, i32) {
    %c0_i32 = arith.constant 0 : i32
    %c0_i32_0 = arith.constant 0 : i32
    %c0_i32_1 = arith.constant 0 : i32
    %c0_i32_2 = arith.constant 0 : i32
    return %c0_i32, %c0_i32_0, %c0_i32_1 : i32, i32, i32
  }
  func.func @transform_2(%arg0: i32, %arg1: i32) -> (i32, i32) {
    %c2_i32 = arith.constant 2 : i32
    %0 = arith.muli %arg0, %c2_i32 : i32
    %1 = arith.addi %0, %arg1 : i32
    %c0_i32 = arith.constant 0 : i32
    %c0_i32_0 = arith.constant 0 : i32
    return %1, %c0_i32 : i32, i32
  }
  func.func @transform_3(%arg0: i32, %arg1: i32) -> (i32, i32, i32) {
    %c2_i32 = arith.constant 2 : i32
    %0 = arith.muli %arg0, %c2_i32 : i32
    %1 = arith.addi %0, %arg1 : i32
    %c0_i32 = arith.constant 0 : i32
    %c0_i32_0 = arith.constant 0 : i32
    %c0_i32_1 = arith.constant 0 : i32
    return %1, %c0_i32, %c0_i32_0 : i32, i32, i32
  }
  func.func @transform_4(%arg0: i32, %arg1: i32) -> (i32, i32, i32) {
    %c2_i32 = arith.constant 2 : i32
    %0 = arith.muli %arg0, %c2_i32 : i32
    %1 = arith.addi %0, %arg1 : i32
    %c0_i32 = arith.constant 0 : i32
    %c0_i32_0 = arith.constant 0 : i32
    %c0_i32_1 = arith.constant 0 : i32
    return %1, %c0_i32, %c0_i32_0 : i32, i32, i32
  }
}

</mosaic_0001>

<llo_original>
// kernel: tpu_custom_call.1
$region0: #{tpu_custom_call.1}
  #allocation0 [shape = 'u32[]', space=smem, size = 0x4, offset = 0x4, fixed_abs, tag = 'smem constant byte address 0x4 - core index']
  #allocation1 [shape = 'u32[72,128]{1,0:T(1,128)}', space=vmem, size = 0x9000, scoped, tag = 'internal scratch']
  %s0 = inlined_call_operand.vmem [shape: f32[2,20,20,4], index: 0, kind: input, shape index: {}]
  %s1 = inlined_call_operand.vmem [shape: f32[9,4,8], index: 1, kind: input, shape index: {}]
  %s2 = inlined_call_operand.vmem [shape: f32[512,8], index: 2, kind: output, shape index: {0}]
  %s3 = inlined_call_operand.hbm [shape: f32[4,1,8], index: 3, kind: output, shape index: {1}]
  %s4 = inlined_call_operand.hbm [shape: f32[4,1,8], index: 4, kind: output, shape index: {2}]
  %5 = xla_tuple %s2, %s3, %s4
  %s6 = sld [smem:[#allocation0]]
  $region57: #{tpu_custom_call.1} parent=0
    _
  %s8 = ssub.s32 1, %s6
  %s9 = scalar_select 0, %s8, %s6
  $region1: #{tpu_custom_call.1} parent=0
    #allocation2 [shape = 'u8[1024]{0}', space=vmem, size = 0x400, scoped, tag = 'output window, operand 1']
    #allocation3 [shape = 's32[2]{0}', space=sflag, size = 0x8, scoped, tag = 'scoped memory for tpu_custom_call.1']
    #allocation4 [shape = 'u8[1024]{0}', space=vmem, size = 0x400, scoped, tag = 'output window, operand 2']
    #allocation5 [shape = 's32[2]{0}', space=sflag, size = 0x8, scoped, tag = 'scoped memory for tpu_custom_call.1']
    %10 = vsyncpa [#allocation3], 0
    %s11 = scalar_lea.sflag [#allocation3], 1
    %12 = vsyncpa %s11, 0
    %13 = vsyncpa [#allocation5], 0
    %s14 = scalar_lea.sflag [#allocation5], 1
    %15 = vsyncpa %s14, 0
    loop: start=0, step=1, limit=6
    $region2: #{tpu_custom_call.1} parent=1 // loop_pre_header
      _
    $region3: #{tpu_custom_call.1} parent=1 // loop_header
      %s17 = sphi 0, %s21
      %p18 = scmp.ge.s32.totalorder %s17, 6
      %s24 = sphi 0, %s36
      %s25 = sphi 0, %s32
      %s26 = sphi 0, %s24
      %s27 = sphi 0, %s25
      %s28 = sphi 0, %s26
      %s29 = sphi 0, %s27
      %s39 = sphi 0, %s41
      %s42 = sphi 0, %s39
      %s43 = sphi 0, %s42
      %s59 = sphi 0, %s43
      %s63 = sphi 0, %s63
      %s65 = sphi 0, %s63
      %s66 = sphi 0, %s65
      %s80 = sphi 0, %s66
      %s90 = sphi 0, %s92
      %s93 = sphi 0, %s90
      %s94 = sphi 0, %s93
      %s110 = sphi 0, %s94
      %s120 = sphi 0, %s122
      %s123 = sphi 0, %s120
      %s124 = sphi 0, %s123
      %s140 = sphi 0, %s124
      %s150 = sphi 0, %s152
      %s153 = sphi 0, %s150
      %s154 = sphi 0, %s153
      %s170 = sphi 0, %s154
    $region4: #{tpu_custom_call.1} parent=1 // loop_header_branch
      %20 = sbr.rel (%p18) target = $region8
    $region5: #{tpu_custom_call.1} parent=1 // loop_body
      %s22 = ssub.s32 %s17, 1
      %s23 = ssub.s32 %s17, 2
      %s30 = sadd.s32 1, %s25
      %p31 = scmp.ge.s32.totalorder %s30, 2
      %s32 = scalar_select %p31, 0, %s30
      %s33 = sadd.s32 1, %s24
      %s34 = scalar_select %p31, %s33, %s24
      %p35 = scmp.ge.s32.totalorder %s34, 2
      %s36 = scalar_select %p35, 0, %s34
      %s37 = ssub.s32 %s24, %s36
      %p38 = scmp.eq.s32.totalorder %s37, 0
      %s40 = sadd.s32 %s39, 1
      %s41 = scalar_select %p38, %s39, %s40
      %p44 = pneg %p38
      %p45 = scmp.eq.s32.totalorder %s17, 3
      %p46 = por %p44, %p45
      %p47 = scmp.ne.s32.totalorder %s39, %s42
      %p48 = scmp.eq.s32.totalorder %s17, 0
      %p49 = por %p47, %p48
      %p50 = scmp.ne.s32.totalorder %s39, %s42
      %p51 = scmp.eq.s32.totalorder %s22, 3
      %p52 = por %p50, %p51
      %p53 = scmp.ne.s32.totalorder %s42, %s43
      %p54 = scmp.eq.s32.totalorder %s22, 0
      %p55 = por %p53, %p54
      %p56 = scmp.ne.s32.totalorder %s42, %s43
      %p57 = scmp.eq.s32.totalorder %s23, 3
      %p58 = por %p56, %p57
      %p60 = scmp.ne.s32.totalorder %s43, %s59
      %p61 = scmp.eq.s32.totalorder %s23, 0
      %p62 = por %p60, %p61
      %s64 = sadd.s32 %s63, 1
      %p67 = scmp.eq.s32.totalorder %s17, 3
      %p68 = scmp.ne.s32.totalorder %s63, %s65
      %p69 = scmp.eq.s32.totalorder %s17, 0
      %p70 = por %p68, %p69
      %p71 = scmp.ne.s32.totalorder %s63, %s65
      %p72 = scmp.eq.s32.totalorder %s22, 3
      %p73 = por %p71, %p72
      %p74 = scmp.ne.s32.totalorder %s65, %s66
      %p75 = scmp.eq.s32.totalorder %s22, 0
      %p76 = por %p74, %p75
      %p77 = scmp.ne.s32.totalorder %s65, %s66
      %p78 = scmp.eq.s32.totalorder %s23, 3
      %p79 = por %p77, %p78
      %p81 = scmp.ne.s32.totalorder %s66, %s80
      %p82 = scmp.eq.s32.totalorder %s23, 0
      %p83 = por %p81, %p82
      %s84 = smul.u32 %s24, 2
      %s85 = sadd.s32 %s84, %s25
      %s86 = smul.u32 %s36, 2
      %s87 = sadd.s32 %s86, %s32
      %s88 = ssub.s32 %s85, %s87
      %p89 = scmp.eq.s32.totalorder %s88, 0
      %s91 = sadd.s32 %s90, 1
      %s92 = scalar_select %p89, %s90, %s91
      %p95 = pneg %p89
      %p96 = scmp.eq.s32.totalorder %s17, 3
      %p97 = por %p95, %p96
      %p98 = scmp.ne.s32.totalorder %s90, %s93
      %p99 = scmp.eq.s32.totalorder %s17, 0
      %p100 = por %p98, %p99
      %p101 = scmp.ne.s32.totalorder %s90, %s93
      %p102 = scmp.eq.s32.totalorder %s22, 3
      %p103 = por %p101, %p102
      %p104 = scmp.ne.s32.totalorder %s93, %s94
      %p105 = scmp.eq.s32.totalorder %s22, 0
      %p106 = por %p104, %p105
      %p107 = scmp.ne.s32.totalorder %s93, %s94
      %p108 = scmp.eq.s32.totalorder %s23, 3
      %p109 = por %p107, %p108
      %p111 = scmp.ne.s32.totalorder %s94, %s110
      %p112 = scmp.eq.s32.totalorder %s23, 0
      %p113 = por %p111, %p112
      %s114 = smul.u32 %s24, 2
      %s115 = sadd.s32 %s114, %s25
      %s116 = smul.u32 %s36, 2
      %s117 = sadd.s32 %s116, %s32
      %s118 = ssub.s32 %s115, %s117
      %p119 = scmp.eq.s32.totalorder %s118, 0
      %s121 = sadd.s32 %s120, 1
      %s122 = scalar_select %p119, %s120, %s121
      %p125 = pneg %p119
      %p126 = scmp.eq.s32.totalorder %s17, 3
      %p127 = por %p125, %p126
      %p128 = scmp.ne.s32.totalorder %s120, %s123
      %p129 = scmp.eq.s32.totalorder %s17, 0
      %p130 = por %p128, %p129
      %p131 = scmp.ne.s32.totalorder %s120, %s123
      %p132 = scmp.eq.s32.totalorder %s22, 3
      %p133 = por %p131, %p132
      %p134 = scmp.ne.s32.totalorder %s123, %s124
      %p135 = scmp.eq.s32.totalorder %s22, 0
      %p136 = por %p134, %p135
      %p137 = scmp.ne.s32.totalorder %s123, %s124
      %p138 = scmp.eq.s32.totalorder %s23, 3
      %p139 = por %p137, %p138
      %p141 = scmp.ne.s32.totalorder %s124, %s140
      %p142 = scmp.eq.s32.totalorder %s23, 0
      %p143 = por %p141, %p142
      %s144 = smul.u32 %s24, 2
      %s145 = sadd.s32 %s144, %s25
      %s146 = smul.u32 %s36, 2
      %s147 = sadd.s32 %s146, %s32
      %s148 = ssub.s32 %s145, %s147
      %p149 = scmp.eq.s32.totalorder %s148, 0
      %s151 = sadd.s32 %s150, 1
      %s152 = scalar_select %p149, %s150, %s151
      %p155 = pneg %p149
      %p156 = scmp.eq.s32.totalorder %s17, 3
      %p157 = por %p155, %p156
      %p158 = scmp.ne.s32.totalorder %s150, %s153
      %p159 = scmp.eq.s32.totalorder %s17, 0
      %p160 = por %p158, %p159
      %p161 = scmp.ne.s32.totalorder %s150, %s153
      %p162 = scmp.eq.s32.totalorder %s22, 3
      %p163 = por %p161, %p162
      %p164 = scmp.ne.s32.totalorder %s153, %s154
      %p165 = scmp.eq.s32.totalorder %s22, 0
      %p166 = por %p164, %p165
      %p167 = scmp.ne.s32.totalorder %s153, %s154
      %p168 = scmp.eq.s32.totalorder %s23, 3
      %p169 = por %p167, %p168
      %p171 = scmp.ne.s32.totalorder %s154, %s170
      %p172 = scmp.eq.s32.totalorder %s23, 0
      %p173 = por %p171, %p172
      %p174 = scmp.le.s32.totalorder 1, %s17
      %p175 = scmp.lt.s32.totalorder %s17, 5
      %p176 = pnand %p174, %p175
      %p177 = pneg %p176
      // Predicated region
      $region9: #{tpu_custom_call.1} parent=5 // pred_check
        _
      $region10: #{tpu_custom_call.1} parent=5 // pred_check_branch
        %179 = sbr.rel (%p176) target = $region12
      $region11: #{tpu_custom_call.1} parent=5 // pred_region
        %s180 = ssub.s32 %s17, 1
        // Predicated region
        $region13: #{tpu_custom_call.1} parent=11 // pred_check
          %p181 = pneg %p76
        $region14: #{tpu_custom_call.1} parent=11 // pred_check_branch
          %183 = sbr.rel (%p181) target = $region16
        $region15: #{tpu_custom_call.1} parent=11 // pred_region
          _
        $region16: #{tpu_custom_call.1} parent=11 // pred_fallthru
          _
      $region12: #{tpu_custom_call.1} parent=5 // pred_fallthru
        _
      %p184 = scmp.lt.s32.totalorder %s17, 4
      // Predicated region
      $region17: #{tpu_custom_call.1} parent=5 // pred_check
        %p185 = pneg %p184
      $region18: #{tpu_custom_call.1} parent=5 // pred_check_branch
        %187 = sbr.rel (%p185) target = $region20
      $region19: #{tpu_custom_call.1} parent=5 // pred_region
        // Predicated region
        $region21: #{tpu_custom_call.1} parent=19 // pred_check
          %p188 = pneg %p49
        $region22: #{tpu_custom_call.1} parent=19 // pred_check_branch
          %190 = sbr.rel (%p188) target = $region24
        $region23: #{tpu_custom_call.1} parent=19 // pred_region
          %p191 = scmp.lt.s32.totalorder %s24, 1
          %s192 = scalar_select %p191, %s24, 1
          %s193 = smul.addr %s192, 60
          %s194 = smul.addr %s193, 8
          %s195 = scalar_lea.vmem %s0, %s194
        $region24: #{tpu_custom_call.1} parent=19 // pred_fallthru
          _
      $region20: #{tpu_custom_call.1} parent=5 // pred_fallthru
        _
      %p196 = scmp.le.s32.totalorder 1, %s17
      %p197 = scmp.lt.s32.totalorder %s17, 5
      %p198 = pnand %p196, %p197
      %p199 = pneg %p198
      // Predicated region
      $region25: #{tpu_custom_call.1} parent=5 // pred_check
        _
      $region26: #{tpu_custom_call.1} parent=5 // pred_check_branch
        %201 = sbr.rel (%p198) target = $region28
      $region27: #{tpu_custom_call.1} parent=5 // pred_region
        %s202 = ssub.s32 %s17, 1
        %p203 = scmp.lt.s32.totalorder %s26, 1
        %s204 = scalar_select %p203, %s26, 1
        %s205 = smul.addr %s204, 60
        %s206 = smul.addr %s205, 8
        %s207 = scalar_lea.vmem %s0, %s206
        %p208 = pneg %p55
        %p209 = pneg %p52
        %p210 = pneg %p76
        %p211 = pneg %p73
        %p212 = pneg %p106
        %p213 = pneg %p103
        %s214 = smul.u32 %s26, 2
        %s215 = sadd.s32 %s214, %s27
        %s216 = smul.u32 16, %s215
        %p217 = scmp.lt.s32.totalorder %s216, 63
        %s218 = scalar_select %p217, %s216, 63
        %s219 = smul.addr %s218, 8
        %s220 = scalar_lea.vmem %s2, %s219
        %p221 = pneg %p136
        %p222 = pneg %p133
        %s223 = sand.u32 %s123, 1
        %s224 = scalar_lea.sflag [#allocation3], %s223
        %s225 = sand.u32 %s123, 1
        %s226 = scalar_lea.vmem [#allocation2], %s225
        %p227 = pneg %p166
        %p228 = pneg %p163
        %s229 = sand.u32 %s153, 1
        %s230 = scalar_lea.sflag [#allocation5], %s229
        %s231 = sand.u32 %s153, 1
        %s232 = scalar_lea.vmem [#allocation4], %s231
        %p233 = scmp.lt.s32.totalorder %s26, 1
        %s234 = scalar_select %p233, %s26, 1
        %s235 = smul.addr %s234, 60
        %s236 = smul.addr %s235, 8
        %s237 = scalar_lea.vmem %s0, %s236
        %s238 = smul.u32 %s26, 2
        %s239 = sadd.s32 %s238, %s27
        %s240 = smul.u32 16, %s239
        %p241 = scmp.lt.s32.totalorder %s240, 63
        %s242 = scalar_select %p241, %s240, 63
        %s243 = smul.addr %s242, 8
        %s244 = scalar_lea.vmem %s2, %s243
        %s245 = smul.u32 %s26, 2
        %s246 = sadd.s32 %s245, %s27
        %s247 = smul.u32 16, %s246
        %s248 = smul.u32 %s26, 2
        %s249 = sadd.s32 %s248, %s27
        %s250 = smul.u32 %s26, 2
        %s251 = sadd.s32 %s250, %s27
        %s252 = smul.u32 %s27, 8
        %s253 = smul.u32 %s252, 24
        %s254 = scalar_lea.vmem %s237, %s253
        %v255 = vld [vmem:[%s254] sm:$0xff]
        %v256 = vld [vmem:[%s254 + $0x8] sm:$0xff]
        %v257 = vld [vmem:[%s254 + $0x10] sm:$0xf]
        %v258 = vld [vmem:[%s254 + $0x18] sm:$0xff]
        %v259 = vld [vmem:[%s254 + $0x20] sm:$0xff]
        %v260 = vld [vmem:[%s254 + $0x28] sm:$0xf]
        %v261 = vld [vmem:[%s254 + $0x30] sm:$0xff]
        %v262 = vld [vmem:[%s254 + $0x38] sm:$0xff]
        %v263 = vld [vmem:[%s254 + $0x40] sm:$0xf]
        %v264 = vld [vmem:[%s254 + $0x48] sm:$0xff]
        %v265 = vld [vmem:[%s254 + $0x50] sm:$0xff]
        %v266 = vld [vmem:[%s254 + $0x58] sm:$0xf]
        %v267 = vld [vmem:[%s254 + $0x60] sm:$0xff]
        %v268 = vld [vmem:[%s254 + $0x68] sm:$0xff]
        %v269 = vld [vmem:[%s254 + $0x70] sm:$0xf]
        %v270 = vld [vmem:[%s254 + $0x78] sm:$0xff]
        %v271 = vld [vmem:[%s254 + $0x80] sm:$0xff]
        %v272 = vld [vmem:[%s254 + $0x88] sm:$0xf]
        %v273 = vld [vmem:[%s254 + $0x90] sm:$0xff]
        %v274 = vld [vmem:[%s254 + $0x98] sm:$0xff]
        %v275 = vld [vmem:[%s254 + $0xa0] sm:$0xf]
        %v276 = vld [vmem:[%s254 + $0xa8] sm:$0xff]
        %v277 = vld [vmem:[%s254 + $0xb0] sm:$0xff]
        %v278 = vld [vmem:[%s254 + $0xb8] sm:$0xf]
        %v279 = vld [vmem:[%s254 + $0xc0] sm:$0xff]
        %v280 = vld [vmem:[%s254 + $0xc8] sm:$0xff]
        %v281 = vld [vmem:[%s254 + $0xd0] sm:$0xf]
        %v282 = vld [vmem:[%s254 + $0xd8] sm:$0xff]
        %v283 = vld [vmem:[%s254 + $0xe0] sm:$0xff]
        %v284 = vld [vmem:[%s254 + $0xe8] sm:$0xf]
        %v285 = vld [vmem:[%s254 + $0xf0] sm:$0xff]
        %v286 = vld [vmem:[%s254 + $0xf8] sm:$0xff]
        %v287 = vld [vmem:[%s254 + $0x100] sm:$0xf]
        %v288 = vld [vmem:[%s254 + $0x108] sm:$0xff]
        %v289 = vld [vmem:[%s254 + $0x110] sm:$0xff]
        %v290 = vld [vmem:[%s254 + $0x118] sm:$0xf]
        %v291 = vmax.f32 %v255, 0.0
        %v292 = vmax.f32 %v256, 0.0
        %v293 = vmax.f32 %v257, 0.0
        %v294 = vmax.f32 %v258, 0.0
        %v295 = vmax.f32 %v259, 0.0
        %v296 = vmax.f32 %v260, 0.0
        %v297 = vmax.f32 %v261, 0.0
        %v298 = vmax.f32 %v262, 0.0
        %v299 = vmax.f32 %v263, 0.0
        %v300 = vmax.f32 %v264, 0.0
        %v301 = vmax.f32 %v265, 0.0
        %v302 = vmax.f32 %v266, 0.0
        %v303 = vmax.f32 %v267, 0.0
        %v304 = vmax.f32 %v268, 0.0
        %v305 = vmax.f32 %v269, 0.0
        %v306 = vmax.f32 %v270, 0.0
        %v307 = vmax.f32 %v271, 0.0
        %v308 = vmax.f32 %v272, 0.0
        %v309 = vmax.f32 %v273, 0.0
        %v310 = vmax.f32 %v274, 0.0
        %v311 = vmax.f32 %v275, 0.0
        %v312 = vmax.f32 %v276, 0.0
        %v313 = vmax.f32 %v277, 0.0
        %v314 = vmax.f32 %v278, 0.0
        %v315 = vmax.f32 %v279, 0.0
        %v316 = vmax.f32 %v280, 0.0
        %v317 = vmax.f32 %v281, 0.0
        %v318 = vmax.f32 %v282, 0.0
        %v319 = vmax.f32 %v283, 0.0
        %v320 = vmax.f32 %v284, 0.0
        %v321 = vmax.f32 %v285, 0.0
        %v322 = vmax.f32 %v286, 0.0
        %v323 = vmax.f32 %v287, 0.0
        %v324 = vmax.f32 %v288, 0.0
        %v325 = vmax.f32 %v289, 0.0
        %v326 = vmax.f32 %v290, 0.0
        %v327 = vld [vmem:[%s1] sm:$0xf]
        %vm352 = vcmask 1045504
        %v353 = vrot.slane %v291, 2
        %v354 = vrot.slane %v292, 2
        %v355 = vsel %vm352, %v353, %v354
        %v356 = vrot.slane %v293, 2
        %v357 = vsel %vm352, %v354, %v356
        %v358 = vrot.slane %v294, 2
        %v359 = vrot.slane %v295, 2
        %v360 = vsel %vm352, %v358, %v359
        %v361 = vrot.slane %v296, 2
        %v362 = vsel %vm352, %v359, %v361
        %v363 = vrot.slane %v297, 2
        %v364 = vrot.slane %v298, 2
        %v365 = vsel %vm352, %v363, %v364
        %v366 = vrot.slane %v299, 2
        %v367 = vsel %vm352, %v364, %v366
        %v368 = vrot.slane %v300, 2
        %v369 = vrot.slane %v301, 2
        %v370 = vsel %vm352, %v368, %v369
        %v371 = vrot.slane %v302, 2
        %v372 = vsel %vm352, %v369, %v371
        %v373 = vrot.slane %v303, 2
        %v374 = vrot.slane %v304, 2
        %v375 = vsel %vm352, %v373, %v374
        %v376 = vrot.slane %v305, 2
        %v377 = vsel %vm352, %v374, %v376
        %v378 = vrot.slane %v306, 2
        %v379 = vrot.slane %v307, 2
        %v380 = vsel %vm352, %v378, %v379
        %v381 = vrot.slane %v308, 2
        %v382 = vsel %vm352, %v379, %v381
        %v383 = vrot.slane %v309, 2
        %v384 = vrot.slane %v310, 2
        %v385 = vsel %vm352, %v383, %v384
        %v386 = vrot.slane %v311, 2
        %v387 = vsel %vm352, %v384, %v386
        %v388 = vrot.slane %v312, 2
        %v389 = vrot.slane %v313, 2
        %v390 = vsel %vm352, %v388, %v389
        %v391 = vrot.slane %v314, 2
        %v392 = vsel %vm352, %v389, %v391
        %s393 = scalar_lea.vmem %s1, 4
        %v394 = vld [vmem:[%s393] sm:$0xf]
        %vm395 = vcmask 31744
        %v396 = vsel %vm395, %v355, 0
        %v398 = vsel %vm395, %v357, 0
        %v400 = vsel %vm395, %v360, 0
        %v402 = vsel %vm395, %v362, 0
        %v404 = vsel %vm395, %v365, 0
        %v406 = vsel %vm395, %v367, 0
        %v408 = vsel %vm395, %v370, 0
        %v410 = vsel %vm395, %v372, 0
        %v412 = vsel %vm395, %v375, 0
        %v414 = vsel %vm395, %v377, 0
        %v416 = vsel %vm395, %v380, 0
        %v418 = vsel %vm395, %v382, 0
        %v420 = vsel %vm395, %v385, 0
        %v422 = vsel %vm395, %v387, 0
        %v424 = vsel %vm395, %v390, 0
        %v426 = vsel %vm395, %v392, 0
        %vm428 = vcmask 1043456
        %v430 = vsel %vm428, %v394, 0
        %432 = vmatpush.msra.mxu0 0.0
        %433 = vmatpush.msra.mxu0 0.0
        %434 = vmatpush.msra.mxu0 0.0
        %435 = vmatpush.msra.mxu0 0.0
        %436 = vmatpush.msra.mxu0 0.0
        %437 = vmatpush.msra.mxu0 0.0
        %438 = vmatpush.msra.mxu0 0.0
        %439 = vmatpush.msra.mxu0 0.0
        %440 = vmatpush.msra.mxu0 0.0
        %441 = vmatpush.msra.mxu0 0.0
        %442 = vmatpush.msra.mxu0 0.0
        %443 = vmatpush.msra.mxu0 0.0
        %444 = vmatpush.msra.mxu0 0.0
        %445 = vmatpush.msra.mxu0 0.0
        %446 = vmatpush.msra.mxu0 0.0
        %447 = vmatpush.msra.mxu0 %v430
        %448 = vmatmul.f32.gmra.mxu0 %v396
        %v449 = vpop.f32.mrf.mxu0
        %v450 = vadd.f32 0.0, %v449
        %451 = vmatmul.f32.gmra.mxu0 %v398
        %v452 = vpop.f32.mrf.mxu0
        %v453 = vadd.f32 0.0, %v452
        %454 = vmatmul.f32.gmra.mxu0 %v400
        %v455 = vpop.f32.mrf.mxu0
        %v456 = vadd.f32 0.0, %v455
        %457 = vmatmul.f32.gmra.mxu0 %v402
        %v458 = vpop.f32.mrf.mxu0
        %v459 = vadd.f32 0.0, %v458
        %460 = vmatmul.f32.gmra.mxu0 %v404
        %v461 = vpop.f32.mrf.mxu0
        %v462 = vadd.f32 0.0, %v461
        %463 = vmatmul.f32.gmra.mxu0 %v406
        %v464 = vpop.f32.mrf.mxu0
        %v465 = vadd.f32 0.0, %v464
        %466 = vmatmul.f32.gmra.mxu0 %v408
        %v467 = vpop.f32.mrf.mxu0
        %v468 = vadd.f32 0.0, %v467
        %469 = vmatmul.f32.gmra.mxu0 %v410
        %v470 = vpop.f32.mrf.mxu0
        %v471 = vadd.f32 0.0, %v470
        %472 = vmatmul.f32.gmra.mxu0 %v412
        %v473 = vpop.f32.mrf.mxu0
        %v474 = vadd.f32 0.0, %v473
        %475 = vmatmul.f32.gmra.mxu0 %v414
        %v476 = vpop.f32.mrf.mxu0
        %v477 = vadd.f32 0.0, %v476
        %478 = vmatmul.f32.gmra.mxu0 %v416
        %v479 = vpop.f32.mrf.mxu0
        %v480 = vadd.f32 0.0, %v479
        %481 = vmatmul.f32.gmra.mxu0 %v418
        %v482 = vpop.f32.mrf.mxu0
        %v483 = vadd.f32 0.0, %v482
        %484 = vmatmul.f32.gmra.mxu0 %v420
        %v485 = vpop.f32.mrf.mxu0
        %v486 = vadd.f32 0.0, %v485
        %487 = vmatmul.f32.gmra.mxu0 %v422
        %v488 = vpop.f32.mrf.mxu0
        %v489 = vadd.f32 0.0, %v488
        %490 = vmatmul.f32.gmra.mxu0 %v424
        %v491 = vpop.f32.mrf.mxu0
        %v492 = vadd.f32 0.0, %v491
        %493 = vmatmul.f32.gmra.mxu0 %v426
        %v494 = vpop.f32.mrf.mxu0
        %v495 = vadd.f32 0.0, %v494
        %496 = vdwg.mxu0
        %v497 = vsel %vm395, %v291, 0
        %v499 = vsel %vm395, %v292, 0
        %v501 = vsel %vm395, %v294, 0
        %v503 = vsel %vm395, %v295, 0
        %v505 = vsel %vm395, %v297, 0
        %v507 = vsel %vm395, %v298, 0
        %v509 = vsel %vm395, %v300, 0
        %v511 = vsel %vm395, %v301, 0
        %v513 = vsel %vm395, %v303, 0
        %v515 = vsel %vm395, %v304, 0
        %v517 = vsel %vm395, %v306, 0
        %v519 = vsel %vm395, %v307, 0
        %v521 = vsel %vm395, %v309, 0
        %v523 = vsel %vm395, %v310, 0
        %v525 = vsel %vm395, %v312, 0
        %v527 = vsel %vm395, %v313, 0
        %v530 = vsel %vm428, %v327, 0
        %532 = vmatpush.msra.mxu0 0.0
        %533 = vmatpush.msra.mxu0 0.0
        %534 = vmatpush.msra.mxu0 0.0
        %535 = vmatpush.msra.mxu0 0.0
        %536 = vmatpush.msra.mxu0 0.0
        %537 = vmatpush.msra.mxu0 0.0
        %538 = vmatpush.msra.mxu0 0.0
        %539 = vmatpush.msra.mxu0 0.0
        %540 = vmatpush.msra.mxu0 0.0
        %541 = vmatpush.msra.mxu0 0.0
        %542 = vmatpush.msra.mxu0 0.0
        %543 = vmatpush.msra.mxu0 0.0
        %544 = vmatpush.msra.mxu0 0.0
        %545 = vmatpush.msra.mxu0 0.0
        %546 = vmatpush.msra.mxu0 0.0
        %547 = vmatpush.msra.mxu0 %v530
        %548 = vmatmul.f32.gmra.mxu0 %v497
        %v549 = vpop.f32.mrf.mxu0
        %v550 = vadd.f32 %v450, %v549
        %551 = vmatmul.f32.gmra.mxu0 %v499
        %v552 = vpop.f32.mrf.mxu0
        %v553 = vadd.f32 %v453, %v552
        %554 = vmatmul.f32.gmra.mxu0 %v501
        %v555 = vpop.f32.mrf.mxu0
        %v556 = vadd.f32 %v456, %v555
        %557 = vmatmul.f32.gmra.mxu0 %v503
        %v558 = vpop.f32.mrf.mxu0
        %v559 = vadd.f32 %v459, %v558
        %560 = vmatmul.f32.gmra.mxu0 %v505
        %v561 = vpop.f32.mrf.mxu0
        %v562 = vadd.f32 %v462, %v561
        %563 = vmatmul.f32.gmra.mxu0 %v507
        %v564 = vpop.f32.mrf.mxu0
        %v565 = vadd.f32 %v465, %v564
        %566 = vmatmul.f32.gmra.mxu0 %v509
        %v567 = vpop.f32.mrf.mxu0
        %v568 = vadd.f32 %v468, %v567
        %569 = vmatmul.f32.gmra.mxu0 %v511
        %v570 = vpop.f32.mrf.mxu0
        %v571 = vadd.f32 %v471, %v570
        %572 = vmatmul.f32.gmra.mxu0 %v513
        %v573 = vpop.f32.mrf.mxu0
        %v574 = vadd.f32 %v474, %v573
        %575 = vmatmul.f32.gmra.mxu0 %v515
        %v576 = vpop.f32.mrf.mxu0
        %v577 = vadd.f32 %v477, %v576
        %578 = vmatmul.f32.gmra.mxu0 %v517
        %v579 = vpop.f32.mrf.mxu0
        %v580 = vadd.f32 %v480, %v579
        %581 = vmatmul.f32.gmra.mxu0 %v519
        %v582 = vpop.f32.mrf.mxu0
        %v583 = vadd.f32 %v483, %v582
        %584 = vmatmul.f32.gmra.mxu0 %v521
        %v585 = vpop.f32.mrf.mxu0
        %v586 = vadd.f32 %v486, %v585
        %587 = vmatmul.f32.gmra.mxu0 %v523
        %v588 = vpop.f32.mrf.mxu0
        %v589 = vadd.f32 %v489, %v588
        %590 = vmatmul.f32.gmra.mxu0 %v525
        %v591 = vpop.f32.mrf.mxu0
        %v592 = vadd.f32 %v492, %v591
        %593 = vmatmul.f32.gmra.mxu0 %v527
        %v594 = vpop.f32.mrf.mxu0
        %v595 = vadd.f32 %v495, %v594
        %596 = vdwg.mxu0
        %v597 = vrot.slane %v291, 4
        %v598 = vrot.slane %v292, 4
        %v599 = vsel %vm428, %v597, %v598
        %v600 = vrot.slane %v293, 4
        %v601 = vsel %vm428, %v598, %v600
        %v602 = vrot.slane %v294, 4
        %v603 = vrot.slane %v295, 4
        %v604 = vsel %vm428, %v602, %v603
        %v605 = vrot.slane %v296, 4
        %v606 = vsel %vm428, %v603, %v605
        %v607 = vrot.slane %v297, 4
        %v608 = vrot.slane %v298, 4
        %v609 = vsel %vm428, %v607, %v608
        %v610 = vrot.slane %v299, 4
        %v611 = vsel %vm428, %v608, %v610
        %v612 = vrot.slane %v300, 4
        %v613 = vrot.slane %v301, 4
        %v614 = vsel %vm428, %v612, %v613
        %v615 = vrot.slane %v302, 4
        %v616 = vsel %vm428, %v613, %v615
        %v617 = vrot.slane %v303, 4
        %v618 = vrot.slane %v304, 4
        %v619 = vsel %vm428, %v617, %v618
        %v620 = vrot.slane %v305, 4
        %v621 = vsel %vm428, %v618, %v620
        %v622 = vrot.slane %v306, 4
        %v623 = vrot.slane %v307, 4
        %v624 = vsel %vm428, %v622, %v623
        %v625 = vrot.slane %v308, 4
        %v626 = vsel %vm428, %v623, %v625
        %v627 = vrot.slane %v309, 4
        %v628 = vrot.slane %v310, 4
        %v629 = vsel %vm428, %v627, %v628
        %v630 = vrot.slane %v311, 4
        %v631 = vsel %vm428, %v628, %v630
        %v632 = vrot.slane %v312, 4
        %v633 = vrot.slane %v313, 4
        %v634 = vsel %vm428, %v632, %v633
        %v635 = vrot.slane %v314, 4
        %v636 = vsel %vm428, %v633, %v635
        %s637 = scalar_lea.vmem %s1, 8
        %v638 = vld [vmem:[%s637] sm:$0xf]
        %v639 = vsel %vm395, %v599, 0
        %v641 = vsel %vm395, %v601, 0
        %v643 = vsel %vm395, %v604, 0
        %v645 = vsel %vm395, %v606, 0
        %v647 = vsel %vm395, %v609, 0
        %v649 = vsel %vm395, %v611, 0
        %v651 = vsel %vm395, %v614, 0
        %v653 = vsel %vm395, %v616, 0
        %v655 = vsel %vm395, %v619, 0
        %v657 = vsel %vm395, %v621, 0
        %v659 = vsel %vm395, %v624, 0
        %v661 = vsel %vm395, %v626, 0
        %v663 = vsel %vm395, %v629, 0
        %v665 = vsel %vm395, %v631, 0
        %v667 = vsel %vm395, %v634, 0
        %v669 = vsel %vm395, %v636, 0
        %v672 = vsel %vm428, %v638, 0
        %674 = vmatpush.msra.mxu0 0.0
        %675 = vmatpush.msra.mxu0 0.0
        %676 = vmatpush.msra.mxu0 0.0
        %677 = vmatpush.msra.mxu0 0.0
        %678 = vmatpush.msra.mxu0 0.0
        %679 = vmatpush.msra.mxu0 0.0
        %680 = vmatpush.msra.mxu0 0.0
        %681 = vmatpush.msra.mxu0 0.0
        %682 = vmatpush.msra.mxu0 0.0
        %683 = vmatpush.msra.mxu0 0.0
        %684 = vmatpush.msra.mxu0 0.0
        %685 = vmatpush.msra.mxu0 0.0
        %686 = vmatpush.msra.mxu0 0.0
        %687 = vmatpush.msra.mxu0 0.0
        %688 = vmatpush.msra.mxu0 0.0
        %689 = vmatpush.msra.mxu0 %v672
        %690 = vmatmul.f32.gmra.mxu0 %v639
        %v691 = vpop.f32.mrf.mxu0
        %v692 = vadd.f32 0.0, %v691
        %693 = vmatmul.f32.gmra.mxu0 %v641
        %v694 = vpop.f32.mrf.mxu0
        %v695 = vadd.f32 0.0, %v694
        %696 = vmatmul.f32.gmra.mxu0 %v643
        %v697 = vpop.f32.mrf.mxu0
        %v698 = vadd.f32 0.0, %v697
        %699 = vmatmul.f32.gmra.mxu0 %v645
        %v700 = vpop.f32.mrf.mxu0
        %v701 = vadd.f32 0.0, %v700
        %702 = vmatmul.f32.gmra.mxu0 %v647
        %v703 = vpop.f32.mrf.mxu0
        %v704 = vadd.f32 0.0, %v703
        %705 = vmatmul.f32.gmra.mxu0 %v649
        %v706 = vpop.f32.mrf.mxu0
        %v707 = vadd.f32 0.0, %v706
        %708 = vmatmul.f32.gmra.mxu0 %v651
        %v709 = vpop.f32.mrf.mxu0
        %v710 = vadd.f32 0.0, %v709
        %711 = vmatmul.f32.gmra.mxu0 %v653
        %v712 = vpop.f32.mrf.mxu0
        %v713 = vadd.f32 0.0, %v712
        %714 = vmatmul.f32.gmra.mxu0 %v655
        %v715 = vpop.f32.mrf.mxu0
        %v716 = vadd.f32 0.0, %v715
        %717 = vmatmul.f32.gmra.mxu0 %v657
        %v718 = vpop.f32.mrf.mxu0
        %v719 = vadd.f32 0.0, %v718
        %720 = vmatmul.f32.gmra.mxu0 %v659
        %v721 = vpop.f32.mrf.mxu0
        %v722 = vadd.f32 0.0, %v721
        %723 = vmatmul.f32.gmra.mxu0 %v661
        %v724 = vpop.f32.mrf.mxu0
        %v725 = vadd.f32 0.0, %v724
        %726 = vmatmul.f32.gmra.mxu0 %v663
        %v727 = vpop.f32.mrf.mxu0
        %v728 = vadd.f32 0.0, %v727
        %729 = vmatmul.f32.gmra.mxu0 %v665
        %v730 = vpop.f32.mrf.mxu0
        %v731 = vadd.f32 0.0, %v730
        %732 = vmatmul.f32.gmra.mxu0 %v667
        %v733 = vpop.f32.mrf.mxu0
        %v734 = vadd.f32 0.0, %v733
        %735 = vmatmul.f32.gmra.mxu0 %v669
        %v736 = vpop.f32.mrf.mxu0
        %v737 = vadd.f32 0.0, %v736
        %738 = vdwg.mxu0
        %v739 = vadd.f32 %v550, %v692
        %v740 = vadd.f32 %v553, %v695
        %v741 = vadd.f32 %v556, %v698
        %v742 = vadd.f32 %v559, %v701
        %v743 = vadd.f32 %v562, %v704
        %v744 = vadd.f32 %v565, %v707
        %v745 = vadd.f32 %v568, %v710
        %v746 = vadd.f32 %v571, %v713
        %v747 = vadd.f32 %v574, %v716
        %v748 = vadd.f32 %v577, %v719
        %v749 = vadd.f32 %v580, %v722
        %v750 = vadd.f32 %v583, %v725
        %v751 = vadd.f32 %v586, %v728
        %v752 = vadd.f32 %v589, %v731
        %v753 = vadd.f32 %v592, %v734
        %v754 = vadd.f32 %v595, %v737
        %s755 = scalar_lea.vmem %s1, 12
        %v756 = vld [vmem:[%s755] sm:$0xf]
        %v758 = vsel %vm395, %v315, 0
        %v761 = vsel %vm395, %v316, 0
        %v764 = vsel %vm395, %v318, 0
        %v767 = vsel %vm395, %v319, 0
        %v770 = vsel %vm428, %v756, 0
        %772 = vmatpush.msra.mxu0 0.0
        %773 = vmatpush.msra.mxu0 0.0
        %774 = vmatpush.msra.mxu0 0.0
        %775 = vmatpush.msra.mxu0 0.0
        %776 = vmatpush.msra.mxu0 0.0
        %777 = vmatpush.msra.mxu0 0.0
        %778 = vmatpush.msra.mxu0 0.0
        %779 = vmatpush.msra.mxu0 0.0
        %780 = vmatpush.msra.mxu0 0.0
        %781 = vmatpush.msra.mxu0 0.0
        %782 = vmatpush.msra.mxu0 0.0
        %783 = vmatpush.msra.mxu0 0.0
        %784 = vmatpush.msra.mxu0 0.0
        %785 = vmatpush.msra.mxu0 0.0
        %786 = vmatpush.msra.mxu0 0.0
        %787 = vmatpush.msra.mxu0 %v770
        %788 = vmatmul.f32.gmra.mxu0 %v505
        %v789 = vpop.f32.mrf.mxu0
        %v790 = vadd.f32 0.0, %v789
        %791 = vmatmul.f32.gmra.mxu0 %v507
        %v792 = vpop.f32.mrf.mxu0
        %v793 = vadd.f32 0.0, %v792
        %794 = vmatmul.f32.gmra.mxu0 %v509
        %v795 = vpop.f32.mrf.mxu0
        %v796 = vadd.f32 0.0, %v795
        %797 = vmatmul.f32.gmra.mxu0 %v511
        %v798 = vpop.f32.mrf.mxu0
        %v799 = vadd.f32 0.0, %v798
        %800 = vmatmul.f32.gmra.mxu0 %v513
        %v801 = vpop.f32.mrf.mxu0
        %v802 = vadd.f32 0.0, %v801
        %803 = vmatmul.f32.gmra.mxu0 %v515
        %v804 = vpop.f32.mrf.mxu0
        %v805 = vadd.f32 0.0, %v804
        %806 = vmatmul.f32.gmra.mxu0 %v517
        %v807 = vpop.f32.mrf.mxu0
        %v808 = vadd.f32 0.0, %v807
        %809 = vmatmul.f32.gmra.mxu0 %v519
        %v810 = vpop.f32.mrf.mxu0
        %v811 = vadd.f32 0.0, %v810
        %812 = vmatmul.f32.gmra.mxu0 %v521
        %v813 = vpop.f32.mrf.mxu0
        %v814 = vadd.f32 0.0, %v813
        %815 = vmatmul.f32.gmra.mxu0 %v523
        %v816 = vpop.f32.mrf.mxu0
        %v817 = vadd.f32 0.0, %v816
        %818 = vmatmul.f32.gmra.mxu0 %v525
        %v819 = vpop.f32.mrf.mxu0
        %v820 = vadd.f32 0.0, %v819
        %821 = vmatmul.f32.gmra.mxu0 %v527
        %v822 = vpop.f32.mrf.mxu0
        %v823 = vadd.f32 0.0, %v822
        %824 = vmatmul.f32.gmra.mxu0 %v758
        %v825 = vpop.f32.mrf.mxu0
        %v826 = vadd.f32 0.0, %v825
        %827 = vmatmul.f32.gmra.mxu0 %v761
        %v828 = vpop.f32.mrf.mxu0
        %v829 = vadd.f32 0.0, %v828
        %830 = vmatmul.f32.gmra.mxu0 %v764
        %v831 = vpop.f32.mrf.mxu0
        %v832 = vadd.f32 0.0, %v831
        %833 = vmatmul.f32.gmra.mxu0 %v767
        %v834 = vpop.f32.mrf.mxu0
        %v835 = vadd.f32 0.0, %v834
        %836 = vdwg.mxu0
        %v837 = vadd.f32 %v739, %v790
        %v838 = vadd.f32 %v740, %v793
        %v839 = vadd.f32 %v741, %v796
        %v840 = vadd.f32 %v742, %v799
        %v841 = vadd.f32 %v743, %v802
        %v842 = vadd.f32 %v744, %v805
        %v843 = vadd.f32 %v745, %v808
        %v844 = vadd.f32 %v746, %v811
        %v845 = vadd.f32 %v747, %v814
        %v846 = vadd.f32 %v748, %v817
        %v847 = vadd.f32 %v749, %v820
        %v848 = vadd.f32 %v750, %v823
        %v849 = vadd.f32 %v751, %v826
        %v850 = vadd.f32 %v752, %v829
        %v851 = vadd.f32 %v753, %v832
        %v852 = vadd.f32 %v754, %v835
        %v855 = vrot.slane %v315, 2
        %v856 = vrot.slane %v316, 2
        %v857 = vsel %vm352, %v855, %v856
        %v858 = vrot.slane %v317, 2
        %v859 = vsel %vm352, %v856, %v858
        %v860 = vrot.slane %v318, 2
        %v861 = vrot.slane %v319, 2
        %v862 = vsel %vm352, %v860, %v861
        %v863 = vrot.slane %v320, 2
        %v864 = vsel %vm352, %v861, %v863
        %s865 = scalar_lea.vmem %s1, 16
        %v866 = vld [vmem:[%s865] sm:$0xf]
        %v867 = vsel %vm395, %v857, 0
        %v869 = vsel %vm395, %v859, 0
        %v871 = vsel %vm395, %v862, 0
        %v873 = vsel %vm395, %v864, 0
        %v876 = vsel %vm428, %v866, 0
        %878 = vmatpush.msra.mxu0 0.0
        %879 = vmatpush.msra.mxu0 0.0
        %880 = vmatpush.msra.mxu0 0.0
        %881 = vmatpush.msra.mxu0 0.0
        %882 = vmatpush.msra.mxu0 0.0
        %883 = vmatpush.msra.mxu0 0.0
        %884 = vmatpush.msra.mxu0 0.0
        %885 = vmatpush.msra.mxu0 0.0
        %886 = vmatpush.msra.mxu0 0.0
        %887 = vmatpush.msra.mxu0 0.0
        %888 = vmatpush.msra.mxu0 0.0
        %889 = vmatpush.msra.mxu0 0.0
        %890 = vmatpush.msra.mxu0 0.0
        %891 = vmatpush.msra.mxu0 0.0
        %892 = vmatpush.msra.mxu0 0.0
        %893 = vmatpush.msra.mxu0 %v876
        %894 = vmatmul.f32.gmra.mxu0 %v404
        %v895 = vpop.f32.mrf.mxu0
        %v896 = vadd.f32 0.0, %v895
        %897 = vmatmul.f32.gmra.mxu0 %v406
        %v898 = vpop.f32.mrf.mxu0
        %v899 = vadd.f32 0.0, %v898
        %900 = vmatmul.f32.gmra.mxu0 %v408
        %v901 = vpop.f32.mrf.mxu0
        %v902 = vadd.f32 0.0, %v901
        %903 = vmatmul.f32.gmra.mxu0 %v410
        %v904 = vpop.f32.mrf.mxu0
        %v905 = vadd.f32 0.0, %v904
        %906 = vmatmul.f32.gmra.mxu0 %v412
        %v907 = vpop.f32.mrf.mxu0
        %v908 = vadd.f32 0.0, %v907
        %909 = vmatmul.f32.gmra.mxu0 %v414
        %v910 = vpop.f32.mrf.mxu0
        %v911 = vadd.f32 0.0, %v910
        %912 = vmatmul.f32.gmra.mxu0 %v416
        %v913 = vpop.f32.mrf.mxu0
        %v914 = vadd.f32 0.0, %v913
        %915 = vmatmul.f32.gmra.mxu0 %v418
        %v916 = vpop.f32.mrf.mxu0
        %v917 = vadd.f32 0.0, %v916
        %918 = vmatmul.f32.gmra.mxu0 %v420
        %v919 = vpop.f32.mrf.mxu0
        %v920 = vadd.f32 0.0, %v919
        %921 = vmatmul.f32.gmra.mxu0 %v422
        %v922 = vpop.f32.mrf.mxu0
        %v923 = vadd.f32 0.0, %v922
        %924 = vmatmul.f32.gmra.mxu0 %v424
        %v925 = vpop.f32.mrf.mxu0
        %v926 = vadd.f32 0.0, %v925
        %927 = vmatmul.f32.gmra.mxu0 %v426
        %v928 = vpop.f32.mrf.mxu0
        %v929 = vadd.f32 0.0, %v928
        %930 = vmatmul.f32.gmra.mxu0 %v867
        %v931 = vpop.f32.mrf.mxu0
        %v932 = vadd.f32 0.0, %v931
        %933 = vmatmul.f32.gmra.mxu0 %v869
        %v934 = vpop.f32.mrf.mxu0
        %v935 = vadd.f32 0.0, %v934
        %936 = vmatmul.f32.gmra.mxu0 %v871
        %v937 = vpop.f32.mrf.mxu0
        %v938 = vadd.f32 0.0, %v937
        %939 = vmatmul.f32.gmra.mxu0 %v873
        %v940 = vpop.f32.mrf.mxu0
        %v941 = vadd.f32 0.0, %v940
        %942 = vdwg.mxu0
        %v943 = vadd.f32 %v837, %v896
        %v944 = vadd.f32 %v838, %v899
        %v945 = vadd.f32 %v839, %v902
        %v946 = vadd.f32 %v840, %v905
        %v947 = vadd.f32 %v841, %v908
        %v948 = vadd.f32 %v842, %v911
        %v949 = vadd.f32 %v843, %v914
        %v950 = vadd.f32 %v844, %v917
        %v951 = vadd.f32 %v845, %v920
        %v952 = vadd.f32 %v846, %v923
        %v953 = vadd.f32 %v847, %v926
        %v954 = vadd.f32 %v848, %v929
        %v955 = vadd.f32 %v849, %v932
        %v956 = vadd.f32 %v850, %v935
        %v957 = vadd.f32 %v851, %v938
        %v958 = vadd.f32 %v852, %v941
        %v959 = vrot.slane %v315, 4
        %v960 = vrot.slane %v316, 4
        %v961 = vsel %vm428, %v959, %v960
        %v962 = vrot.slane %v317, 4
        %v963 = vsel %vm428, %v960, %v962
        %v964 = vrot.slane %v318, 4
        %v965 = vrot.slane %v319, 4
        %v966 = vsel %vm428, %v964, %v965
        %v967 = vrot.slane %v320, 4
        %v968 = vsel %vm428, %v965, %v967
        %s969 = scalar_lea.vmem %s1, 20
        %v970 = vld [vmem:[%s969] sm:$0xf]
        %v971 = vsel %vm395, %v961, 0
        %v973 = vsel %vm395, %v963, 0
        %v975 = vsel %vm395, %v966, 0
        %v977 = vsel %vm395, %v968, 0
        %v980 = vsel %vm428, %v970, 0
        %982 = vmatpush.msra.mxu0 0.0
        %983 = vmatpush.msra.mxu0 0.0
        %984 = vmatpush.msra.mxu0 0.0
        %985 = vmatpush.msra.mxu0 0.0
        %986 = vmatpush.msra.mxu0 0.0
        %987 = vmatpush.msra.mxu0 0.0
        %988 = vmatpush.msra.mxu0 0.0
        %989 = vmatpush.msra.mxu0 0.0
        %990 = vmatpush.msra.mxu0 0.0
        %991 = vmatpush.msra.mxu0 0.0
        %992 = vmatpush.msra.mxu0 0.0
        %993 = vmatpush.msra.mxu0 0.0
        %994 = vmatpush.msra.mxu0 0.0
        %995 = vmatpush.msra.mxu0 0.0
        %996 = vmatpush.msra.mxu0 0.0
        %997 = vmatpush.msra.mxu0 %v980
        %998 = vmatmul.f32.gmra.mxu0 %v647
        %v999 = vpop.f32.mrf.mxu0
        %v1000 = vadd.f32 0.0, %v999
        %1001 = vmatmul.f32.gmra.mxu0 %v649
        %v1002 = vpop.f32.mrf.mxu0
        %v1003 = vadd.f32 0.0, %v1002
        %1004 = vmatmul.f32.gmra.mxu0 %v651
        %v1005 = vpop.f32.mrf.mxu0
        %v1006 = vadd.f32 0.0, %v1005
        %1007 = vmatmul.f32.gmra.mxu0 %v653
        %v1008 = vpop.f32.mrf.mxu0
        %v1009 = vadd.f32 0.0, %v1008
        %1010 = vmatmul.f32.gmra.mxu0 %v655
        %v1011 = vpop.f32.mrf.mxu0
        %v1012 = vadd.f32 0.0, %v1011
        %1013 = vmatmul.f32.gmra.mxu0 %v657
        %v1014 = vpop.f32.mrf.mxu0
        %v1015 = vadd.f32 0.0, %v1014
        %1016 = vmatmul.f32.gmra.mxu0 %v659
        %v1017 = vpop.f32.mrf.mxu0
        %v1018 = vadd.f32 0.0, %v1017
        %1019 = vmatmul.f32.gmra.mxu0 %v661
        %v1020 = vpop.f32.mrf.mxu0
        %v1021 = vadd.f32 0.0, %v1020
        %1022 = vmatmul.f32.gmra.mxu0 %v663
        %v1023 = vpop.f32.mrf.mxu0
        %v1024 = vadd.f32 0.0, %v1023
        %1025 = vmatmul.f32.gmra.mxu0 %v665
        %v1026 = vpop.f32.mrf.mxu0
        %v1027 = vadd.f32 0.0, %v1026
        %1028 = vmatmul.f32.gmra.mxu0 %v667
        %v1029 = vpop.f32.mrf.mxu0
        %v1030 = vadd.f32 0.0, %v1029
        %1031 = vmatmul.f32.gmra.mxu0 %v669
        %v1032 = vpop.f32.mrf.mxu0
        %v1033 = vadd.f32 0.0, %v1032
        %1034 = vmatmul.f32.gmra.mxu0 %v971
        %v1035 = vpop.f32.mrf.mxu0
        %v1036 = vadd.f32 0.0, %v1035
        %1037 = vmatmul.f32.gmra.mxu0 %v973
        %v1038 = vpop.f32.mrf.mxu0
        %v1039 = vadd.f32 0.0, %v1038
        %1040 = vmatmul.f32.gmra.mxu0 %v975
        %v1041 = vpop.f32.mrf.mxu0
        %v1042 = vadd.f32 0.0, %v1041
        %1043 = vmatmul.f32.gmra.mxu0 %v977
        %v1044 = vpop.f32.mrf.mxu0
        %v1045 = vadd.f32 0.0, %v1044
        %1046 = vdwg.mxu0
        %v1047 = vadd.f32 %v943, %v1000
        %v1048 = vadd.f32 %v944, %v1003
        %v1049 = vadd.f32 %v945, %v1006
        %v1050 = vadd.f32 %v946, %v1009
        %v1051 = vadd.f32 %v947, %v1012
        %v1052 = vadd.f32 %v948, %v1015
        %v1053 = vadd.f32 %v949, %v1018
        %v1054 = vadd.f32 %v950, %v1021
        %v1055 = vadd.f32 %v951, %v1024
        %v1056 = vadd.f32 %v952, %v1027
        %v1057 = vadd.f32 %v953, %v1030
        %v1058 = vadd.f32 %v954, %v1033
        %v1059 = vadd.f32 %v955, %v1036
        %v1060 = vadd.f32 %v956, %v1039
        %v1061 = vadd.f32 %v957, %v1042
        %v1062 = vadd.f32 %v958, %v1045
        %s1063 = scalar_lea.vmem %s1, 24
        %v1064 = vld [vmem:[%s1063] sm:$0xf]
        %v1066 = vsel %vm395, %v321, 0
        %v1069 = vsel %vm395, %v322, 0
        %v1072 = vsel %vm395, %v324, 0
        %v1075 = vsel %vm395, %v325, 0
        %v1078 = vsel %vm428, %v1064, 0
        %1080 = vmatpush.msra.mxu0 0.0
        %1081 = vmatpush.msra.mxu0 0.0
        %1082 = vmatpush.msra.mxu0 0.0
        %1083 = vmatpush.msra.mxu0 0.0
        %1084 = vmatpush.msra.mxu0 0.0
        %1085 = vmatpush.msra.mxu0 0.0
        %1086 = vmatpush.msra.mxu0 0.0
        %1087 = vmatpush.msra.mxu0 0.0
        %1088 = vmatpush.msra.mxu0 0.0
        %1089 = vmatpush.msra.mxu0 0.0
        %1090 = vmatpush.msra.mxu0 0.0
        %1091 = vmatpush.msra.mxu0 0.0
        %1092 = vmatpush.msra.mxu0 0.0
        %1093 = vmatpush.msra.mxu0 0.0
        %1094 = vmatpush.msra.mxu0 0.0
        %1095 = vmatpush.msra.mxu0 %v1078
        %1096 = vmatmul.f32.gmra.mxu0 %v513
        %v1097 = vpop.f32.mrf.mxu0
        %v1098 = vadd.f32 0.0, %v1097
        %1099 = vmatmul.f32.gmra.mxu0 %v515
        %v1100 = vpop.f32.mrf.mxu0
        %v1101 = vadd.f32 0.0, %v1100
        %1102 = vmatmul.f32.gmra.mxu0 %v517
        %v1103 = vpop.f32.mrf.mxu0
        %v1104 = vadd.f32 0.0, %v1103
        %1105 = vmatmul.f32.gmra.mxu0 %v519
        %v1106 = vpop.f32.mrf.mxu0
        %v1107 = vadd.f32 0.0, %v1106
        %1108 = vmatmul.f32.gmra.mxu0 %v521
        %v1109 = vpop.f32.mrf.mxu0
        %v1110 = vadd.f32 0.0, %v1109
        %1111 = vmatmul.f32.gmra.mxu0 %v523
        %v1112 = vpop.f32.mrf.mxu0
        %v1113 = vadd.f32 0.0, %v1112
        %1114 = vmatmul.f32.gmra.mxu0 %v525
        %v1115 = vpop.f32.mrf.mxu0
        %v1116 = vadd.f32 0.0, %v1115
        %1117 = vmatmul.f32.gmra.mxu0 %v527
        %v1118 = vpop.f32.mrf.mxu0
        %v1119 = vadd.f32 0.0, %v1118
        %1120 = vmatmul.f32.gmra.mxu0 %v758
        %v1121 = vpop.f32.mrf.mxu0
        %v1122 = vadd.f32 0.0, %v1121
        %1123 = vmatmul.f32.gmra.mxu0 %v761
        %v1124 = vpop.f32.mrf.mxu0
        %v1125 = vadd.f32 0.0, %v1124
        %1126 = vmatmul.f32.gmra.mxu0 %v764
        %v1127 = vpop.f32.mrf.mxu0
        %v1128 = vadd.f32 0.0, %v1127
        %1129 = vmatmul.f32.gmra.mxu0 %v767
        %v1130 = vpop.f32.mrf.mxu0
        %v1131 = vadd.f32 0.0, %v1130
        %1132 = vmatmul.f32.gmra.mxu0 %v1066
        %v1133 = vpop.f32.mrf.mxu0
        %v1134 = vadd.f32 0.0, %v1133
        %1135 = vmatmul.f32.gmra.mxu0 %v1069
        %v1136 = vpop.f32.mrf.mxu0
        %v1137 = vadd.f32 0.0, %v1136
        %1138 = vmatmul.f32.gmra.mxu0 %v1072
        %v1139 = vpop.f32.mrf.mxu0
        %v1140 = vadd.f32 0.0, %v1139
        %1141 = vmatmul.f32.gmra.mxu0 %v1075
        %v1142 = vpop.f32.mrf.mxu0
        %v1143 = vadd.f32 0.0, %v1142
        %1144 = vdwg.mxu0
        %v1145 = vadd.f32 %v1047, %v1098
        %v1146 = vadd.f32 %v1048, %v1101
        %v1147 = vadd.f32 %v1049, %v1104
        %v1148 = vadd.f32 %v1050, %v1107
        %v1149 = vadd.f32 %v1051, %v1110
        %v1150 = vadd.f32 %v1052, %v1113
        %v1151 = vadd.f32 %v1053, %v1116
        %v1152 = vadd.f32 %v1054, %v1119
        %v1153 = vadd.f32 %v1055, %v1122
        %v1154 = vadd.f32 %v1056, %v1125
        %v1155 = vadd.f32 %v1057, %v1128
        %v1156 = vadd.f32 %v1058, %v1131
        %v1157 = vadd.f32 %v1059, %v1134
        %v1158 = vadd.f32 %v1060, %v1137
        %v1159 = vadd.f32 %v1061, %v1140
        %v1160 = vadd.f32 %v1062, %v1143
        %v1163 = vrot.slane %v321, 2
        %v1164 = vrot.slane %v322, 2
        %v1165 = vsel %vm352, %v1163, %v1164
        %v1166 = vrot.slane %v323, 2
        %v1167 = vsel %vm352, %v1164, %v1166
        %v1168 = vrot.slane %v324, 2
        %v1169 = vrot.slane %v325, 2
        %v1170 = vsel %vm352, %v1168, %v1169
        %v1171 = vrot.slane %v326, 2
        %v1172 = vsel %vm352, %v1169, %v1171
        %s1173 = scalar_lea.vmem %s1, 28
        %v1174 = vld [vmem:[%s1173] sm:$0xf]
        %v1175 = vsel %vm395, %v1165, 0
        %v1177 = vsel %vm395, %v1167, 0
        %v1179 = vsel %vm395, %v1170, 0
        %v1181 = vsel %vm395, %v1172, 0
        %v1184 = vsel %vm428, %v1174, 0
        %1186 = vmatpush.msra.mxu0 0.0
        %1187 = vmatpush.msra.mxu0 0.0
        %1188 = vmatpush.msra.mxu0 0.0
        %1189 = vmatpush.msra.mxu0 0.0
        %1190 = vmatpush.msra.mxu0 0.0
        %1191 = vmatpush.msra.mxu0 0.0
        %1192 = vmatpush.msra.mxu0 0.0
        %1193 = vmatpush.msra.mxu0 0.0
        %1194 = vmatpush.msra.mxu0 0.0
        %1195 = vmatpush.msra.mxu0 0.0
        %1196 = vmatpush.msra.mxu0 0.0
        %1197 = vmatpush.msra.mxu0 0.0
        %1198 = vmatpush.msra.mxu0 0.0
        %1199 = vmatpush.msra.mxu0 0.0
        %1200 = vmatpush.msra.mxu0 0.0
        %1201 = vmatpush.msra.mxu0 %v1184
        %1202 = vmatmul.f32.gmra.mxu0 %v412
        %v1203 = vpop.f32.mrf.mxu0
        %v1204 = vadd.f32 0.0, %v1203
        %1205 = vmatmul.f32.gmra.mxu0 %v414
        %v1206 = vpop.f32.mrf.mxu0
        %v1207 = vadd.f32 0.0, %v1206
        %1208 = vmatmul.f32.gmra.mxu0 %v416
        %v1209 = vpop.f32.mrf.mxu0
        %v1210 = vadd.f32 0.0, %v1209
        %1211 = vmatmul.f32.gmra.mxu0 %v418
        %v1212 = vpop.f32.mrf.mxu0
        %v1213 = vadd.f32 0.0, %v1212
        %1214 = vmatmul.f32.gmra.mxu0 %v420
        %v1215 = vpop.f32.mrf.mxu0
        %v1216 = vadd.f32 0.0, %v1215
        %1217 = vmatmul.f32.gmra.mxu0 %v422
        %v1218 = vpop.f32.mrf.mxu0
        %v1219 = vadd.f32 0.0, %v1218
        %1220 = vmatmul.f32.gmra.mxu0 %v424
        %v1221 = vpop.f32.mrf.mxu0
        %v1222 = vadd.f32 0.0, %v1221
        %1223 = vmatmul.f32.gmra.mxu0 %v426
        %v1224 = vpop.f32.mrf.mxu0
        %v1225 = vadd.f32 0.0, %v1224
        %1226 = vmatmul.f32.gmra.mxu0 %v867
        %v1227 = vpop.f32.mrf.mxu0
        %v1228 = vadd.f32 0.0, %v1227
        %1229 = vmatmul.f32.gmra.mxu0 %v869
        %v1230 = vpop.f32.mrf.mxu0
        %v1231 = vadd.f32 0.0, %v1230
        %1232 = vmatmul.f32.gmra.mxu0 %v871
        %v1233 = vpop.f32.mrf.mxu0
        %v1234 = vadd.f32 0.0, %v1233
        %1235 = vmatmul.f32.gmra.mxu0 %v873
        %v1236 = vpop.f32.mrf.mxu0
        %v1237 = vadd.f32 0.0, %v1236
        %1238 = vmatmul.f32.gmra.mxu0 %v1175
        %v1239 = vpop.f32.mrf.mxu0
        %v1240 = vadd.f32 0.0, %v1239
        %1241 = vmatmul.f32.gmra.mxu0 %v1177
        %v1242 = vpop.f32.mrf.mxu0
        %v1243 = vadd.f32 0.0, %v1242
        %1244 = vmatmul.f32.gmra.mxu0 %v1179
        %v1245 = vpop.f32.mrf.mxu0
        %v1246 = vadd.f32 0.0, %v1245
        %1247 = vmatmul.f32.gmra.mxu0 %v1181
        %v1248 = vpop.f32.mrf.mxu0
        %v1249 = vadd.f32 0.0, %v1248
        %1250 = vdwg.mxu0
        %v1251 = vadd.f32 %v1145, %v1204
        %v1252 = vadd.f32 %v1146, %v1207
        %v1253 = vadd.f32 %v1147, %v1210
        %v1254 = vadd.f32 %v1148, %v1213
        %v1255 = vadd.f32 %v1149, %v1216
        %v1256 = vadd.f32 %v1150, %v1219
        %v1257 = vadd.f32 %v1151, %v1222
        %v1258 = vadd.f32 %v1152, %v1225
        %v1259 = vadd.f32 %v1153, %v1228
        %v1260 = vadd.f32 %v1154, %v1231
        %v1261 = vadd.f32 %v1155, %v1234
        %v1262 = vadd.f32 %v1156, %v1237
        %v1263 = vadd.f32 %v1157, %v1240
        %v1264 = vadd.f32 %v1158, %v1243
        %v1265 = vadd.f32 %v1159, %v1246
        %v1266 = vadd.f32 %v1160, %v1249
        %v1267 = vrot.slane %v321, 4
        %v1268 = vrot.slane %v322, 4
        %v1269 = vsel %vm428, %v1267, %v1268
        %v1270 = vrot.slane %v323, 4
        %v1271 = vsel %vm428, %v1268, %v1270
        %v1272 = vrot.slane %v324, 4
        %v1273 = vrot.slane %v325, 4
        %v1274 = vsel %vm428, %v1272, %v1273
        %v1275 = vrot.slane %v326, 4
        %v1276 = vsel %vm428, %v1273, %v1275
        %s1277 = scalar_lea.vmem %s1, 32
        %v1278 = vld [vmem:[%s1277] sm:$0xf]
        %v1279 = vsel %vm395, %v1269, 0
        %v1281 = vsel %vm395, %v1271, 0
        %v1283 = vsel %vm395, %v1274, 0
        %v1285 = vsel %vm395, %v1276, 0
        %v1288 = vsel %vm428, %v1278, 0
        %1290 = vmatpush.msra.mxu0 0.0
        %1291 = vmatpush.msra.mxu0 0.0
        %1292 = vmatpush.msra.mxu0 0.0
        %1293 = vmatpush.msra.mxu0 0.0
        %1294 = vmatpush.msra.mxu0 0.0
        %1295 = vmatpush.msra.mxu0 0.0
        %1296 = vmatpush.msra.mxu0 0.0
        %1297 = vmatpush.msra.mxu0 0.0
        %1298 = vmatpush.msra.mxu0 0.0
        %1299 = vmatpush.msra.mxu0 0.0
        %1300 = vmatpush.msra.mxu0 0.0
        %1301 = vmatpush.msra.mxu0 0.0
        %1302 = vmatpush.msra.mxu0 0.0
        %1303 = vmatpush.msra.mxu0 0.0
        %1304 = vmatpush.msra.mxu0 0.0
        %1305 = vmatpush.msra.mxu0 %v1288
        %1306 = vmatmul.f32.gmra.mxu0 %v655
        %v1307 = vpop.f32.mrf.mxu0
        %v1308 = vadd.f32 0.0, %v1307
        %1309 = vmatmul.f32.gmra.mxu0 %v657
        %v1310 = vpop.f32.mrf.mxu0
        %v1311 = vadd.f32 0.0, %v1310
        %1312 = vmatmul.f32.gmra.mxu0 %v659
        %v1313 = vpop.f32.mrf.mxu0
        %v1314 = vadd.f32 0.0, %v1313
        %1315 = vmatmul.f32.gmra.mxu0 %v661
        %v1316 = vpop.f32.mrf.mxu0
        %v1317 = vadd.f32 0.0, %v1316
        %1318 = vmatmul.f32.gmra.mxu0 %v663
        %v1319 = vpop.f32.mrf.mxu0
        %v1320 = vadd.f32 0.0, %v1319
        %1321 = vmatmul.f32.gmra.mxu0 %v665
        %v1322 = vpop.f32.mrf.mxu0
        %v1323 = vadd.f32 0.0, %v1322
        %1324 = vmatmul.f32.gmra.mxu0 %v667
        %v1325 = vpop.f32.mrf.mxu0
        %v1326 = vadd.f32 0.0, %v1325
        %1327 = vmatmul.f32.gmra.mxu0 %v669
        %v1328 = vpop.f32.mrf.mxu0
        %v1329 = vadd.f32 0.0, %v1328
        %1330 = vmatmul.f32.gmra.mxu0 %v971
        %v1331 = vpop.f32.mrf.mxu0
        %v1332 = vadd.f32 0.0, %v1331
        %1333 = vmatmul.f32.gmra.mxu0 %v973
        %v1334 = vpop.f32.mrf.mxu0
        %v1335 = vadd.f32 0.0, %v1334
        %1336 = vmatmul.f32.gmra.mxu0 %v975
        %v1337 = vpop.f32.mrf.mxu0
        %v1338 = vadd.f32 0.0, %v1337
        %1339 = vmatmul.f32.gmra.mxu0 %v977
        %v1340 = vpop.f32.mrf.mxu0
        %v1341 = vadd.f32 0.0, %v1340
        %1342 = vmatmul.f32.gmra.mxu0 %v1279
        %v1343 = vpop.f32.mrf.mxu0
        %v1344 = vadd.f32 0.0, %v1343
        %1345 = vmatmul.f32.gmra.mxu0 %v1281
        %v1346 = vpop.f32.mrf.mxu0
        %v1347 = vadd.f32 0.0, %v1346
        %1348 = vmatmul.f32.gmra.mxu0 %v1283
        %v1349 = vpop.f32.mrf.mxu0
        %v1350 = vadd.f32 0.0, %v1349
        %1351 = vmatmul.f32.gmra.mxu0 %v1285
        %v1352 = vpop.f32.mrf.mxu0
        %v1353 = vadd.f32 0.0, %v1352
        %1354 = vdwg.mxu0
        %v1355 = vadd.f32 %v1251, %v1308
        %v1356 = vadd.f32 %v1252, %v1311
        %v1357 = vadd.f32 %v1253, %v1314
        %v1358 = vadd.f32 %v1254, %v1317
        %v1359 = vadd.f32 %v1255, %v1320
        %v1360 = vadd.f32 %v1256, %v1323
        %v1361 = vadd.f32 %v1257, %v1326
        %v1362 = vadd.f32 %v1258, %v1329
        %v1363 = vadd.f32 %v1259, %v1332
        %v1364 = vadd.f32 %v1260, %v1335
        %v1365 = vadd.f32 %v1261, %v1338
        %v1366 = vadd.f32 %v1262, %v1341
        %v1367 = vadd.f32 %v1263, %v1344
        %v1368 = vadd.f32 %v1264, %v1347
        %v1369 = vadd.f32 %v1265, %v1350
        %v1370 = vadd.f32 %v1266, %v1353
        %vm1371 = vcmask 64512
        %1372 = vst.msk [vmem:[%s244] sm:$0xff] %vm1371, %v1355
        %1373 = vst.msk [vmem:[%s244 + $0x8] sm:$0xff] %vm1371, %v1356
        %1374 = vst.msk [vmem:[%s244 + $0x10] sm:$0xff] %vm1371, %v1357
        %1375 = vst.msk [vmem:[%s244 + $0x18] sm:$0xff] %vm1371, %v1358
        %1376 = vst.msk [vmem:[%s244 + $0x20] sm:$0xff] %vm1371, %v1359
        %1377 = vst.msk [vmem:[%s244 + $0x28] sm:$0xff] %vm1371, %v1360
        %1378 = vst.msk [vmem:[%s244 + $0x30] sm:$0xff] %vm1371, %v1361
        %1379 = vst.msk [vmem:[%s244 + $0x38] sm:$0xff] %vm1371, %v1362
        %1380 = vst.msk [vmem:[%s244 + $0x40] sm:$0xff] %vm1371, %v1363
        %1381 = vst.msk [vmem:[%s244 + $0x48] sm:$0xff] %vm1371, %v1364
        %1382 = vst.msk [vmem:[%s244 + $0x50] sm:$0xff] %vm1371, %v1365
        %1383 = vst.msk [vmem:[%s244 + $0x58] sm:$0xff] %vm1371, %v1366
        %1384 = vst.msk [vmem:[%s244 + $0x60] sm:$0xff] %vm1371, %v1367
        %1385 = vst.msk [vmem:[%s244 + $0x68] sm:$0xff] %vm1371, %v1368
        %1386 = vst.msk [vmem:[%s244 + $0x70] sm:$0xff] %vm1371, %v1369
        %1387 = vst.msk [vmem:[%s244 + $0x78] sm:$0xff] %vm1371, %v1370
        %v1388 = vsel %vm1371, %v1355, 0.0
        %v1389 = vsel %vm1371, %v1356, 0.0
        %v1390 = vadd.f32 %v1388, %v1389
        %v1391 = vsel %vm1371, %v1357, 0.0
        %v1392 = vadd.f32 %v1390, %v1391
        %v1393 = vsel %vm1371, %v1358, 0.0
        %v1394 = vadd.f32 %v1392, %v1393
        %v1395 = vsel %vm1371, %v1359, 0.0
        %v1396 = vadd.f32 %v1394, %v1395
        %v1397 = vsel %vm1371, %v1360, 0.0
        %v1398 = vadd.f32 %v1396, %v1397
        %v1399 = vsel %vm1371, %v1361, 0.0
        %v1400 = vadd.f32 %v1398, %v1399
        %v1401 = vsel %vm1371, %v1362, 0.0
        %v1402 = vadd.f32 %v1400, %v1401
        %v1403 = vsel %vm1371, %v1363, 0.0
        %v1404 = vadd.f32 %v1402, %v1403
        %v1405 = vsel %vm1371, %v1364, 0.0
        %v1406 = vadd.f32 %v1404, %v1405
        %v1407 = vsel %vm1371, %v1365, 0.0
        %v1408 = vadd.f32 %v1406, %v1407
        %v1409 = vsel %vm1371, %v1366, 0.0
        %v1410 = vadd.f32 %v1408, %v1409
        %v1411 = vsel %vm1371, %v1367, 0.0
        %v1412 = vadd.f32 %v1410, %v1411
        %v1413 = vsel %vm1371, %v1368, 0.0
        %v1414 = vadd.f32 %v1412, %v1413
        %v1415 = vsel %vm1371, %v1369, 0.0
        %v1416 = vadd.f32 %v1414, %v1415
        %v1417 = vsel %vm1371, %v1370, 0.0
        %v1418 = vadd.f32 %v1416, %v1417
        %v1419 = vrot.slane %v1418, 4
        %v1420 = vadd.f32 %v1418, %v1419
        %v1421 = vrot.slane %v1420, 2
        %v1422 = vadd.f32 %v1420, %v1421
        %v1423 = vrot.slane %v1422, 1
        %v1424 = vadd.f32 %v1422, %v1423
        %vm1425 = vcmask 57344
        %1426 = vst.msk [vmem:[%s226] sm:$0x1] %vm1425, %v1424
        %v1427 = vmul.f32 %v1355, %v1355
        %v1428 = vmul.f32 %v1356, %v1356
        %v1429 = vmul.f32 %v1357, %v1357
        %v1430 = vmul.f32 %v1358, %v1358
        %v1431 = vmul.f32 %v1359, %v1359
        %v1432 = vmul.f32 %v1360, %v1360
        %v1433 = vmul.f32 %v1361, %v1361
        %v1434 = vmul.f32 %v1362, %v1362
        %v1435 = vmul.f32 %v1363, %v1363
        %v1436 = vmul.f32 %v1364, %v1364
        %v1437 = vmul.f32 %v1365, %v1365
        %v1438 = vmul.f32 %v1366, %v1366
        %v1439 = vmul.f32 %v1367, %v1367
        %v1440 = vmul.f32 %v1368, %v1368
        %v1441 = vmul.f32 %v1369, %v1369
        %v1442 = vmul.f32 %v1370, %v1370
        %v1443 = vsel %vm1371, %v1427, 0.0
        %v1444 = vsel %vm1371, %v1428, 0.0
        %v1445 = vadd.f32 %v1443, %v1444
        %v1446 = vsel %vm1371, %v1429, 0.0
        %v1447 = vadd.f32 %v1445, %v1446
        %v1448 = vsel %vm1371, %v1430, 0.0
        %v1449 = vadd.f32 %v1447, %v1448
        %v1450 = vsel %vm1371, %v1431, 0.0
        %v1451 = vadd.f32 %v1449, %v1450
        %v1452 = vsel %vm1371, %v1432, 0.0
        %v1453 = vadd.f32 %v1451, %v1452
        %v1454 = vsel %vm1371, %v1433, 0.0
        %v1455 = vadd.f32 %v1453, %v1454
        %v1456 = vsel %vm1371, %v1434, 0.0
        %v1457 = vadd.f32 %v1455, %v1456
        %v1458 = vsel %vm1371, %v1435, 0.0
        %v1459 = vadd.f32 %v1457, %v1458
        %v1460 = vsel %vm1371, %v1436, 0.0
        %v1461 = vadd.f32 %v1459, %v1460
        %v1462 = vsel %vm1371, %v1437, 0.0
        %v1463 = vadd.f32 %v1461, %v1462
        %v1464 = vsel %vm1371, %v1438, 0.0
        %v1465 = vadd.f32 %v1463, %v1464
        %v1466 = vsel %vm1371, %v1439, 0.0
        %v1467 = vadd.f32 %v1465, %v1466
        %v1468 = vsel %vm1371, %v1440, 0.0
        %v1469 = vadd.f32 %v1467, %v1468
        %v1470 = vsel %vm1371, %v1441, 0.0
        %v1471 = vadd.f32 %v1469, %v1470
        %v1472 = vsel %vm1371, %v1442, 0.0
        %v1473 = vadd.f32 %v1471, %v1472
        %v1474 = vrot.slane %v1473, 4
        %v1475 = vadd.f32 %v1473, %v1474
        %v1476 = vrot.slane %v1475, 2
        %v1477 = vadd.f32 %v1475, %v1476
        %v1478 = vrot.slane %v1477, 1
        %v1479 = vadd.f32 %v1477, %v1478
        %1480 = vst.msk [vmem:[%s232] sm:$0x1] %vm1425, %v1479
        %s1481 = smul.u32 %s26, 2
        %s1482 = sadd.s32 %s1481, %s27
        %s1483 = smul.u32 16, %s1482
        %p1484 = scmp.lt.s32.totalorder %s1483, 63
        %s1485 = scalar_select %p1484, %s1483, 63
        %s1486 = smul.addr %s1485, 8
        %s1487 = scalar_lea.vmem %s2, %s1486
        %s1488 = sand.u32 %s123, 1
        %s1489 = scalar_lea.sflag [#allocation3], %s1488
        %s1490 = sand.u32 %s123, 1
        %s1491 = scalar_lea.vmem [#allocation2], %s1490
        %s1492 = sand.u32 %s153, 1
        %s1493 = scalar_lea.sflag [#allocation5], %s1492
        %s1494 = sand.u32 %s153, 1
        %s1495 = scalar_lea.vmem [#allocation4], %s1494
        // Predicated region
        $region29: #{tpu_custom_call.1} parent=27 // pred_check
          %p1496 = pneg %p103
        $region30: #{tpu_custom_call.1} parent=27 // pred_check_branch
          %1498 = sbr.rel (%p1496) target = $region32
        $region31: #{tpu_custom_call.1} parent=27 // pred_region
          %s1499 = smul.u32 %s26, 2
          %s1500 = sadd.s32 %s1499, %s27
          %s1501 = smul.u32 16, %s1500
        $region32: #{tpu_custom_call.1} parent=27 // pred_fallthru
          _
        // Predicated region
        $region33: #{tpu_custom_call.1} parent=27 // pred_check
          %p1502 = pneg %p133
        $region34: #{tpu_custom_call.1} parent=27 // pred_check_branch
          %1504 = sbr.rel (%p1502) target = $region36
        $region35: #{tpu_custom_call.1} parent=27 // pred_region
          %s1505 = smul.u32 %s26, 2
          %s1506 = sadd.s32 %s1505, %s27
          %1508 = vsyncadd %s1489, 0
          %s1509 = scalar_lea.hbm %s3, %s1506
          %s1511 = sshll.u32 %s1491, 4
          %s1512 = int_to_ptr.vmem [resolvable:$true] %s1511
          %s1513 = sshll.u32 %s1509, 4
          %s1514 = int_to_ptr.hbm [resolvable:$true] %s1513
          %1516 = dma.vmem_to_hbm [thread:$0]  %s1512, 16, %s1514, %s1489
        $region36: #{tpu_custom_call.1} parent=27 // pred_fallthru
          _
        // Predicated region
        $region37: #{tpu_custom_call.1} parent=27 // pred_check
          %p1517 = pneg %p163
        $region38: #{tpu_custom_call.1} parent=27 // pred_check_branch
          %1519 = sbr.rel (%p1517) target = $region40
        $region39: #{tpu_custom_call.1} parent=27 // pred_region
          %s1520 = smul.u32 %s26, 2
          %s1521 = sadd.s32 %s1520, %s27
          %1523 = vsyncadd %s1493, 0
          %s1524 = scalar_lea.hbm %s4, %s1521
          %s1526 = sshll.u32 %s1495, 4
          %s1527 = int_to_ptr.vmem [resolvable:$true] %s1526
          %s1528 = sshll.u32 %s1524, 4
          %s1529 = int_to_ptr.hbm [resolvable:$true] %s1528
          %1531 = dma.vmem_to_hbm [thread:$0]  %s1527, 16, %s1529, %s1493
        $region40: #{tpu_custom_call.1} parent=27 // pred_fallthru
          _
      $region28: #{tpu_custom_call.1} parent=5 // pred_fallthru
        _
      %p1532 = scmp.le.s32.totalorder 2, %s17
      // Predicated region
      $region41: #{tpu_custom_call.1} parent=5 // pred_check
        %p1533 = pneg %p1532
      $region42: #{tpu_custom_call.1} parent=5 // pred_check_branch
        %1535 = sbr.rel (%p1533) target = $region44
      $region43: #{tpu_custom_call.1} parent=5 // pred_region
        %s1536 = ssub.s32 %s17, 2
        // Predicated region
        $region45: #{tpu_custom_call.1} parent=43 // pred_check
          %p1537 = pneg %p109
        $region46: #{tpu_custom_call.1} parent=43 // pred_check_branch
          %1539 = sbr.rel (%p1537) target = $region48
        $region47: #{tpu_custom_call.1} parent=43 // pred_region
          %s1540 = smul.u32 %s28, 2
          %s1541 = sadd.s32 %s1540, %s29
          %s1542 = smul.u32 16, %s1541
          %p1543 = scmp.lt.s32.totalorder %s1542, 63
          %s1544 = scalar_select %p1543, %s1542, 63
          %s1545 = smul.addr %s1544, 8
          %s1546 = scalar_lea.vmem %s2, %s1545
        $region48: #{tpu_custom_call.1} parent=43 // pred_fallthru
          _
        // Predicated region
        $region49: #{tpu_custom_call.1} parent=43 // pred_check
          %p1547 = pneg %p139
        $region50: #{tpu_custom_call.1} parent=43 // pred_check_branch
          %1549 = sbr.rel (%p1547) target = $region52
        $region51: #{tpu_custom_call.1} parent=43 // pred_region
          %s1550 = sand.u32 %s124, 1
          %s1551 = scalar_lea.sflag [#allocation3], %s1550
          %s1552 = sand.u32 %s124, 1
          %s1553 = scalar_lea.vmem [#allocation2], %s1552
          %1555 = dma.done %s1551, 16
        $region52: #{tpu_custom_call.1} parent=43 // pred_fallthru
          _
        // Predicated region
        $region53: #{tpu_custom_call.1} parent=43 // pred_check
          %p1556 = pneg %p169
        $region54: #{tpu_custom_call.1} parent=43 // pred_check_branch
          %1558 = sbr.rel (%p1556) target = $region56
        $region55: #{tpu_custom_call.1} parent=43 // pred_region
          %s1559 = sand.u32 %s154, 1
          %s1560 = scalar_lea.sflag [#allocation5], %s1559
          %s1561 = sand.u32 %s154, 1
          %s1562 = scalar_lea.vmem [#allocation4], %s1561
          %1564 = dma.done %s1560, 16
        $region56: #{tpu_custom_call.1} parent=43 // pred_fallthru
          _
      $region44: #{tpu_custom_call.1} parent=5 // pred_fallthru
        _
    $region6: #{tpu_custom_call.1} parent=1 // loop_footer
      %s21 = sadd.s32 1, %s17
    $region7: #{tpu_custom_call.1} parent=1 // loop_footer_branch
      %16 = sbr.rel target = $region3
    $region8: #{tpu_custom_call.1} parent=1 // loop_exit
      _
    %1565 = vsyncpa [#allocation3], 1
    %s1566 = scalar_lea.sflag [#allocation3], 1
    %1567 = vsyncpa %s1566, 1
    %1568 = vsyncpa [#allocation5], 1
    %s1569 = scalar_lea.sflag [#allocation5], 1
    %1570 = vsyncpa %s1569, 1

</llo_original>
